<compile_context>
chip_gen: v7x
topology: tpu7x:2x2x1
jax: 0.10.0
libtpu: 0.0.40
codegen_flags: <defaults>
</compile_context>

<pallas_src>
import functools

import jax
import jax.numpy as jnp
from jax.experimental import pallas as pl
from jax.experimental.pallas import tpu as pltpu

BN_EPS = 1e-5


# ---------------------------------------------------------------------------
# In-kernel matmul helpers
# ---------------------------------------------------------------------------
def _mxu_dot(a, b, precise):
    """MXU matmul with f32 accumulation.

    fast (precise=False): both operands cast to bf16, single MXU pass.
    precise=True        : bf16x3 compensated product (~f32 fidelity) used by
                          the dev-loop tight-tolerance build; avoids relying on
                          any default f32 matmul precision behaviour.
    """
    if not precise:
        return jnp.dot(a.astype(jnp.bfloat16), b.astype(jnp.bfloat16),
                       preferred_element_type=jnp.float32)
    a32 = a.astype(jnp.float32)
    b32 = b.astype(jnp.float32)
    a_hi = a32.astype(jnp.bfloat16)
    a_lo = (a32 - a_hi.astype(jnp.float32)).astype(jnp.bfloat16)
    b_hi = b32.astype(jnp.bfloat16)
    b_lo = (b32 - b_hi.astype(jnp.float32)).astype(jnp.bfloat16)
    return (jnp.dot(a_hi, b_hi, preferred_element_type=jnp.float32)
            + jnp.dot(a_hi, b_lo, preferred_element_type=jnp.float32)
            + jnp.dot(a_lo, b_hi, preferred_element_type=jnp.float32))


def _pool_dot(x, m):
    """x (f32) @ m, where m is an exact {0,1} bf16 indicator matrix.

    Splits x into a bf16 high part + bf16 residual (relative error ~2^-17,
    f32 accumulation) so the BatchNorm statistics never silently degrade to a
    single bf16 MXU pass.
    """
    x_hi = x.astype(jnp.bfloat16)
    x_lo = (x - x_hi.astype(jnp.float32)).astype(jnp.bfloat16)
    return (jnp.dot(x_hi, m, preferred_element_type=jnp.float32)
            + jnp.dot(x_lo, m, preferred_element_type=jnp.float32))


# ---------------------------------------------------------------------------
# Kernel
# ---------------------------------------------------------------------------
def _st_block_kernel(a_ref, x_ref,
                     wb1_ref, e1_ref, et1_ref, v1_ref,
                     wb2_ref, e2_ref, et2_ref, v2_ref,
                     wb3_ref, e3_ref, et3_ref, v3_ref,
                     wcb_ref, bcc_ref,
                     o_ref, *, inv_nt, precise):
    """Single-block fused STBlock forward; activations are (N, C*T) slabs."""
    # TODO(synk): node-row grid (dimension_semantics=("parallel",)) with a
    # two-pass BatchNorm for graphs above the single-block VMEM budget and to
    # use both TensorCores on v7x; dense A_hat aggregation is also kept for
    # generality (no sparse gather message-passing path).
    A = a_ref[...]                                            # (N, N)

    def gcn_bn_relu(h, wb_ref, e_ref, et_ref, v_ref):
        # GraphConv(norm='both'): A_hat @ h @ W + b as two lane-dense 2-D dots
        # (W_block = kron(W, I_T) -> no reshape/relayout between them).
        agg = _mxu_dot(A, h, precise)                         # (N, Cin*T)
        hw = _mxu_dot(agg, wb_ref[...], precise)              # (N, Cout*T)
        v = v_ref[...]                                        # (3, Cout*T): [bias; gamma; beta]
        hw = hw + v[0:1, :]
        # BatchNorm1d, training-mode batch stats (biased variance), one pass:
        # column sums of x and x^2 (fused into one (2,CT) slab), pooled per
        # channel with a (CT,C) 0/1 indicator (factored pool -- no (CT,CT)
        # matrix), then broadcast back to CT columns with the (C,CT) indicator.
        s = jnp.concatenate(
            [jnp.sum(hw, axis=0, keepdims=True),
             jnp.sum(hw * hw, axis=0, keepdims=True)], axis=0)       # (2, CT)
        pooled = _pool_dot(s, e_ref[...]) * inv_nt                   # (2, C): [E[x]; E[x^2]]
        mean_c = pooled[0:1, :]
        var_c = jnp.maximum(pooled[1:2, :] - mean_c * mean_c, 0.0)   # clamp: no rsqrt(<0)
        stats = _pool_dot(jnp.concatenate([mean_c, var_c], axis=0),
                          et_ref[...])                               # (2, CT)
        scale = v[1:2, :] * jax.lax.rsqrt(stats[1:2, :] + BN_EPS)
        shift = v[2:3, :] - stats[0:1, :] * scale
        return jnp.maximum(hw * scale + shift, 0.0)                  # ReLU

    h = x_ref[...]                                            # (N, f_in*T)
    h = gcn_bn_relu(h, wb1_ref, e1_ref, et1_ref, v1_ref)
    h = gcn_bn_relu(h, wb2_ref, e2_ref, et2_ref, v2_ref)
    h = gcn_bn_relu(h, wb3_ref, e3_ref, et3_ref, v3_ref)

    # Temporal Conv1d(f_out, f_out, k=3, padding=1): one banded block matmul;
    # output lands directly in (N, f_out*T) NCL order (free reshape outside).
    # TODO(synk): kron / banded-dense formulation inflates MXU FLOPs by ~T and
    # ~T/3; exploit the block structure once the kernel becomes MXU-bound.
    o_ref[...] = _mxu_dot(h, wcb_ref[...], precise) + bcc_ref[...]


# ---------------------------------------------------------------------------
# One-time parameter preparation (hoisted out of the per-call path)
# ---------------------------------------------------------------------------
def _nbytes(x):
    return int(x.size) * jnp.dtype(x.dtype).itemsize


def _gcn_dims(f_in, f_out):
    hidden = [(f_in * (4 - i) + f_out * i) // 4 for i in (1, 4)]
    return [f_in] + hidden + [f_out]


def prepare_kernel_params(params, a_hat, n_nodes, t_len, mxu_dtype):
    """Build the kernel-side block matrices from PyTorch-layout parameters.
    Called ONCE per model by make_st_block_forward."""
    del n_nodes  # (1/(N*T) is passed to the kernel as a static scalar)
    kp = {'a': a_hat.astype(mxu_dtype)}
    eye_t = jnp.eye(t_len, dtype=jnp.float32)
    for l in range(1, 4):
        w = params[f'w{l}']                                   # (cin, cout)
        cout = w.shape[1]
        # channel-mixing block weight: kron(W, I_T) -> (cin*T, cout*T)
        kp[f'wb{l}'] = jnp.kron(w, eye_t).astype(mxu_dtype)
        # factored BatchNorm pool: 0/1 channel indicators (CT, C) and (C, CT)
        ind = jnp.kron(jnp.eye(cout, dtype=jnp.float32),
                       jnp.ones((t_len, 1), jnp.float32))     # (cout*T, cout)
        kp[f'e{l}'] = ind.astype(jnp.bfloat16)
        kp[f'et{l}'] = ind.T.astype(jnp.bfloat16)
        # bias / gamma / beta tiled over the T replicas of each channel column
        kp[f'v{l}'] = jnp.stack(
            [jnp.repeat(params[f'b{l}'], t_len),
             jnp.repeat(params[f'g{l}'], t_len),
             jnp.repeat(params[f'be{l}'], t_len)], axis=0).astype(jnp.float32)
    # Banded block matrix for Conv1d(k=3, padding=1) along T:
    #   Wc_block[c*T + s, d*T + t] = wconv[d, c, s - t + 1] if |s - t| <= 1 else 0
    wconv = params['wconv']                                   # (out, in, 3) torch layout
    f_out = wconv.shape[0]
    s_idx = jnp.arange(t_len)[:, None]
    t_idx = jnp.arange(t_len)[None, :]
    k_idx = s_idx - t_idx + 1                                 # (T, T)
    valid = (k_idx >= 0) & (k_idx <= 2)
    w_cdk = jnp.transpose(wconv, (1, 0, 2))                   # (in, out, 3)
    taps = jnp.where(valid[None, None, :, :],
                     w_cdk[:, :, jnp.clip(k_idx, 0, 2)], 0.0)  # (in, out, T, T)
    kp['wcb'] = jnp.transpose(taps, (0, 2, 1, 3)).reshape(
        f_out * t_len, f_out * t_len).astype(mxu_dtype)
    kp['bcc'] = jnp.repeat(params['bconv'], t_len)[None, :].astype(jnp.float32)
    return kp


def _vmem_budget_bytes():
    """Per-generation single-block VMEM budget with headroom for compiler
    scratch / output buffers: ~48 MiB on v7x (64 MiB VMEM), ~100 MiB on
    v5e/v6e (128 MiB VMEM)."""
    try:
        cap = int(pltpu.get_tpu_info().vmem_capacity_bytes)
    except Exception:
        cap = 64 * 2**20                      # conservative (v7x-sized) fallback
    return min(cap - 16 * 2**20, int(0.8 * cap))


def make_st_block_forward(params, a_hat, *, n_nodes, f_in, f_out, t_len,
                          mxu_dtype=jnp.bfloat16):
    """Build the STBlock forward pass.

    All host-side block-matrix prep runs ONCE here; the returned callable is a
    jitted apply (reshape + one pallas_call), so repeated calls pay no prep.

    mxu_dtype=jnp.bfloat16 : production path (bf16 MXU inputs, f32 accumulation)
    mxu_dtype=jnp.float32  : dev-loop path (bf16x3 compensated matmuls,
                             ~f32 fidelity, for tight-tolerance checks)
    """
    precise = jnp.dtype(mxu_dtype) == jnp.dtype(jnp.float32)
    dims = _gcn_dims(f_in, f_out)
    assert dims[-1] == f_out == params['w3'].shape[1]
    ct = [d * t_len for d in dims]                            # slab widths per stage

    kp = prepare_kernel_params(params, a_hat, n_nodes, t_len, mxu_dtype)
    weight_keys = tuple(f'{n}{l}' for l in (1, 2, 3)
                        for n in ('wb', 'e', 'et', 'v')) + ('wcb', 'bcc')

    act_dtype = jnp.float32 if precise else jnp.bfloat16
    x_bytes = n_nodes * ct[0] * jnp.dtype(act_dtype).itemsize
    out_bytes = n_nodes * ct[-1] * 4
    io_bytes = sum(_nbytes(kp[k]) for k in ('a',) + weight_keys) + x_bytes + out_bytes
    est_live_bytes = io_bytes + 10 * n_nodes * max(ct) * 4    # activation temporaries
    budget = _vmem_budget_bytes()
    if est_live_bytes > budget:
        # TODO(synk): node-row tiled path (parallel grid + two-pass BatchNorm
        # accumulation) for problems above the single-block VMEM budget.
        raise ValueError(
            f"problem (~{est_live_bytes / 2**20:.1f} MiB) exceeds the "
            f"single-block VMEM budget (~{budget / 2**20:.1f} MiB); "
            "node-row tiling not implemented")
    vmem_limit = int(min(budget, max(32 * 2**20, 2 * est_live_bytes)))

    flops = 0
    for l in range(3):
        flops += 2 * n_nodes * n_nodes * ct[l]                # A_hat @ h
        flops += 2 * n_nodes * ct[l] * ct[l + 1]              # h @ kron(W, I_T)
        flops += 8 * ct[l + 1] * dims[l + 1]                  # factored BN pooling (tiny)
    flops += 2 * n_nodes * ct[3] * ct[3]                      # banded temporal conv
    if precise:
        flops *= 3                                            # bf16x3 compensation

    vmem = pl.BlockSpec(memory_space=pltpu.MemorySpace.VMEM)
    n_inputs = 2 + len(weight_keys)
    call = pl.pallas_call(
        functools.partial(_st_block_kernel,
                          inv_nt=1.0 / float(n_nodes * t_len),
                          precise=precise),
        out_shape=jax.ShapeDtypeStruct((n_nodes, f_out * t_len), jnp.float32),
        in_specs=[vmem] * n_inputs,
        out_specs=vmem,
        compiler_params=pltpu.CompilerParams(vmem_limit_bytes=vmem_limit),
        cost_estimate=pl.CostEstimate(flops=int(flops),
                                      transcendentals=int(sum(ct[1:])),
                                      bytes_accessed=int(io_bytes)),
    )

    @jax.jit
    def _apply(kp, temporal_features):
        # channel-major flatten == PyTorch NCL layout -> free reshape, no transpose
        x_slab = temporal_features.reshape(n_nodes, f_in * t_len).astype(act_dtype)
        out = call(kp['a'], x_slab, *(kp[k] for k in weight_keys))
        return out.reshape(n_nodes, f_out, t_len)             # (N, f_out, T) f32

    def forward(temporal_features):
        return _apply(kp, temporal_features)

    return forward


# ---------------------------------------------------------------------------
# Demo parameters, graph, and pure-JAX reference
# ---------------------------------------------------------------------------
def init_params(key, f_in, f_out):
    """PyTorch-layout parameters; bias/gamma/beta perturbed away from the
    framework defaults (0 / 1) so the demo check exercises those paths."""
    dims = _gcn_dims(f_in, f_out)
    keys = jax.random.split(key, 14)
    p = {}
    for idx in range(3):
        cin, cout = dims[idx], dims[idx + 1]
        k = keys[4 * idx: 4 * idx + 4]
        p[f'w{idx + 1}'] = (jax.random.normal(k[0], (cin, cout), jnp.float32)
                            / jnp.sqrt(jnp.float32(cin)))
        p[f'b{idx + 1}'] = 0.1 * jax.random.normal(k[1], (cout,), jnp.float32)
        p[f'g{idx + 1}'] = 1.0 + 0.1 * jax.random.normal(k[2], (cout,), jnp.float32)
        p[f'be{idx + 1}'] = 0.1 * jax.random.normal(k[3], (cout,), jnp.float32)
    p['wconv'] = (jax.random.normal(keys[12], (f_out, f_out, 3), jnp.float32)
                  / jnp.sqrt(jnp.float32(3 * f_out)))
    p['bconv'] = 0.05 * jax.random.normal(keys[13], (f_out,), jnp.float32)
    return p


def ring_batch_adjacency(batch_size, nodes_per_graph):
    """Block-diagonal symmetric ring graphs (a batched DGL graph), DGL-style
    symmetric normalization D^-1/2 A D^-1/2, degree clamped >=1, no self loops."""
    n = batch_size * nodes_per_graph
    rows, cols = [], []
    for b in range(batch_size):
        off = b * nodes_per_graph
        for i in range(nodes_per_graph):
            j = (i + 1) % nodes_per_graph
            rows += [off + i, off + j]
            cols += [off + j, off + i]
    adj = jnp.zeros((n, n), jnp.float32).at[jnp.array(rows), jnp.array(cols)].set(1.0)
    d_inv_sqrt = jax.lax.rsqrt(jnp.maximum(adj.sum(axis=1), 1.0))
    return adj * d_inv_sqrt[:, None] * d_inv_sqrt[None, :]


def st_block_reference(a_hat, temporal_features, params):
    """Pure-JAX f32 reference of the PyTorch STBlock forward.  Matmuls run at
    HIGHEST precision so the tight dev-loop check is meaningful on TPU."""
    prec = jax.lax.Precision.HIGHEST
    h = jnp.transpose(temporal_features, (0, 2, 1))           # (N, T, f_in)
    for l in range(1, 4):
        w, b = params[f'w{l}'], params[f'b{l}']
        g, be = params[f'g{l}'], params[f'be{l}']
        agg = jnp.einsum('ij,jtc->itc', a_hat, h, precision=prec)
        hw = jnp.einsum('itc,cd->itd', agg, w, precision=prec) + b
        mean = hw.mean(axis=(0, 1))
        var = ((hw - mean) ** 2).mean(axis=(0, 1))
        hn = (hw - mean) * jax.lax.rsqrt(var + BN_EPS) * g + be
        h = jnp.maximum(hn, 0.0)
    wc, bc = params['wconv'], params['bconv']                 # (out, in, 3), (out,)
    hp = jnp.pad(h, ((0, 0), (1, 1), (0, 0)))
    y = (jnp.einsum('ntc,dc->ntd', hp[:, :-2], wc[:, :, 0], precision=prec) +
         jnp.einsum('ntc,dc->ntd', hp[:, 1:-1], wc[:, :, 1], precision=prec) +
         jnp.einsum('ntc,dc->ntd', hp[:, 2:], wc[:, :, 2], precision=prec) + bc)
    return jnp.transpose(y, (0, 2, 1))                        # (N, f_out, T)


if __name__ == "__main__":
    key = jax.random.PRNGKey(0)
    batch_size, nodes_per_graph = 2, 16      # 2 disconnected subgraphs (batched graph)
    f_in, f_out, t_len = 8, 8, 16            # f_out * T = 128 -> lane-dense slabs
    n_nodes = batch_size * nodes_per_graph

    k_feat, k_par = jax.random.split(key)
    temporal_features = jax.random.normal(k_feat, (n_nodes, f_in, t_len), jnp.float32)
    params = init_params(k_par, f_in, f_out)
    a_hat = ring_batch_adjacency(batch_size, nodes_per_graph)

    # Production path: block matrices prepared once, jitted apply (bf16 MXU).
    fwd = make_st_block_forward(params, a_hat, n_nodes=n_nodes, f_in=f_in,
                                f_out=f_out, t_len=t_len, mxu_dtype=jnp.bfloat16)
    out = jax.block_until_ready(fwd(temporal_features))
    out = jax.block_until_ready(fwd(temporal_features))   # cached path: no re-prep
    assert out.shape == (n_nodes, f_out, t_len), out.shape

    # Dev-loop tight check: ~f32-fidelity kernel build vs HIGHEST-precision ref.
    fwd_precise = make_st_block_forward(params, a_hat, n_nodes=n_nodes, f_in=f_in,
                                        f_out=f_out, t_len=t_len,
                                        mxu_dtype=jnp.float32)
    out_precise = jax.block_until_ready(fwd_precise(temporal_features))

    ref = jax.block_until_ready(st_block_reference(a_hat, temporal_features, params))

    err_precise = float(jnp.max(jnp.abs(out_precise - ref)))
    err_bf16 = float(jnp.max(jnp.abs(out - ref)))
    if err_precise < 1e-3 and err_bf16 < 1e-1:
        print("KERNEL_OK")
    else:
        print(f"MISMATCH err_precise={err_precise} err_bf16={err_bf16}")
</pallas_src>

<mosaic_0001>
module attributes {stable_mosaic.version = 11 : i64} {
  func.func @_st_block_kernel(%arg0: memref<32x32xbf16, #tpu.memory_space<vmem>>, %arg1: memref<32x128xbf16, #tpu.memory_space<vmem>>, %arg2: memref<128x128xbf16, #tpu.memory_space<vmem>>, %arg3: memref<128x8xbf16, #tpu.memory_space<vmem>>, %arg4: memref<8x128xbf16, #tpu.memory_space<vmem>>, %arg5: memref<3x128xf32, #tpu.memory_space<vmem>>, %arg6: memref<128x128xbf16, #tpu.memory_space<vmem>>, %arg7: memref<128x8xbf16, #tpu.memory_space<vmem>>, %arg8: memref<8x128xbf16, #tpu.memory_space<vmem>>, %arg9: memref<3x128xf32, #tpu.memory_space<vmem>>, %arg10: memref<128x128xbf16, #tpu.memory_space<vmem>>, %arg11: memref<128x8xbf16, #tpu.memory_space<vmem>>, %arg12: memref<8x128xbf16, #tpu.memory_space<vmem>>, %arg13: memref<3x128xf32, #tpu.memory_space<vmem>>, %arg14: memref<128x128xbf16, #tpu.memory_space<vmem>>, %arg15: memref<1x128xf32, #tpu.memory_space<vmem>>, %arg16: memref<32x128xf32, #tpu.memory_space<vmem>>) attributes {dimension_semantics = [], scalar_prefetch = 0 : i64, scratch_operands = 0 : i64, tpu.core_type = #tpu.core_type<tc>} {
    %c0 = arith.constant 0 : index
    %c0_0 = arith.constant 0 : index
    %0 = vector.load %arg0[%c0, %c0_0] : memref<32x32xbf16, #tpu.memory_space<vmem>>, vector<32x32xbf16>
    %c0_1 = arith.constant 0 : index
    %c0_2 = arith.constant 0 : index
    %1 = vector.load %arg1[%c0_1, %c0_2] : memref<32x128xbf16, #tpu.memory_space<vmem>>, vector<32x128xbf16>
    %cst = arith.constant dense<0.000000e+00> : vector<32x128xf32>
    %2 = tpu.matmul %0, %1, %cst {dimension_numbers = #tpu.dot_dimension_numbers<[1], [0], [0], [1], [0, 0, 1, 1], [], []>} : vector<32x32xbf16>, vector<32x128xbf16>, vector<32x128xf32> -> vector<32x128xf32>
    %c0_3 = arith.constant 0 : index
    %c0_4 = arith.constant 0 : index
    %3 = vector.load %arg2[%c0_3, %c0_4] : memref<128x128xbf16, #tpu.memory_space<vmem>>, vector<128x128xbf16>
    %4 = arith.truncf %2 : vector<32x128xf32> to vector<32x128xbf16>
    %cst_5 = arith.constant dense<0.000000e+00> : vector<32x128xf32>
    %5 = tpu.matmul %4, %3, %cst_5 {dimension_numbers = #tpu.dot_dimension_numbers<[1], [0], [0], [1], [0, 0, 1, 1], [], []>} : vector<32x128xbf16>, vector<128x128xbf16>, vector<32x128xf32> -> vector<32x128xf32>
    %c0_6 = arith.constant 0 : index
    %c0_7 = arith.constant 0 : index
    %6 = vector.load %arg5[%c0_6, %c0_7] : memref<3x128xf32, #tpu.memory_space<vmem>>, vector<3x128xf32>
    %7 = vector.extract_strided_slice %6 {offsets = [0, 0], sizes = [1, 128], strides = [1, 1]} : vector<3x128xf32> to vector<1x128xf32>
    %8 = vector.broadcast %7 : vector<1x128xf32> to vector<32x128xf32>
    %9 = arith.addf %5, %8 : vector<32x128xf32>
    %cst_8 = arith.constant dense<0.000000e+00> : vector<128xf32>
    %10 = vector.multi_reduction <add>, %9, %cst_8 [0] : vector<32x128xf32> to vector<128xf32>
    %11 = vector.shape_cast %10 : vector<128xf32> to vector<1x128xf32>
    %12 = arith.mulf %9, %9 : vector<32x128xf32>
    %cst_9 = arith.constant dense<0.000000e+00> : vector<128xf32>
    %13 = vector.multi_reduction <add>, %12, %cst_9 [0] : vector<32x128xf32> to vector<128xf32>
    %14 = vector.shape_cast %13 : vector<128xf32> to vector<1x128xf32>
    %15 = tpu.concatenate %11, %14 in 0 : vector<1x128xf32>, vector<1x128xf32> -> vector<2x128xf32>
    %c0_10 = arith.constant 0 : index
    %c0_11 = arith.constant 0 : index
    %16 = vector.load %arg3[%c0_10, %c0_11] : memref<128x8xbf16, #tpu.memory_space<vmem>>, vector<128x8xbf16>
    %17 = arith.truncf %15 : vector<2x128xf32> to vector<2x128xbf16>
    %18 = arith.extf %17 : vector<2x128xbf16> to vector<2x128xf32>
    %19 = arith.subf %15, %18 : vector<2x128xf32>
    %20 = arith.truncf %19 : vector<2x128xf32> to vector<2x128xbf16>
    %cst_12 = arith.constant dense<0.000000e+00> : vector<2x8xf32>
    %21 = tpu.matmul %17, %16, %cst_12 {dimension_numbers = #tpu.dot_dimension_numbers<[1], [0], [0], [1], [0, 0, 1, 1], [], []>} : vector<2x128xbf16>, vector<128x8xbf16>, vector<2x8xf32> -> vector<2x8xf32>
    %cst_13 = arith.constant dense<0.000000e+00> : vector<2x8xf32>
    %22 = tpu.matmul %20, %16, %cst_13 {dimension_numbers = #tpu.dot_dimension_numbers<[1], [0], [0], [1], [0, 0, 1, 1], [], []>} : vector<2x128xbf16>, vector<128x8xbf16>, vector<2x8xf32> -> vector<2x8xf32>
    %23 = arith.addf %21, %22 : vector<2x8xf32>
    %cst_14 = arith.constant 0.001953125 : f32
    %24 = vector.broadcast %cst_14 : f32 to vector<2x8xf32>
    %25 = arith.mulf %23, %24 : vector<2x8xf32>
    %26 = vector.extract_strided_slice %25 {offsets = [0, 0], sizes = [1, 8], strides = [1, 1]} : vector<2x8xf32> to vector<1x8xf32>
    %27 = vector.extract_strided_slice %25 {offsets = [1, 0], sizes = [1, 8], strides = [1, 1]} : vector<2x8xf32> to vector<1x8xf32>
    %28 = arith.mulf %26, %26 : vector<1x8xf32>
    %29 = arith.subf %27, %28 : vector<1x8xf32>
    %cst_15 = arith.constant 0.000000e+00 : f32
    %30 = vector.broadcast %cst_15 : f32 to vector<1x8xf32>
    %31 = arith.maximumf %29, %30 : vector<1x8xf32>
    %32 = tpu.concatenate %26, %31 in 0 : vector<1x8xf32>, vector<1x8xf32> -> vector<2x8xf32>
    %c0_16 = arith.constant 0 : index
    %c0_17 = arith.constant 0 : index
    %33 = vector.load %arg4[%c0_16, %c0_17] : memref<8x128xbf16, #tpu.memory_space<vmem>>, vector<8x128xbf16>
    %34 = arith.truncf %32 : vector<2x8xf32> to vector<2x8xbf16>
    %35 = arith.extf %34 : vector<2x8xbf16> to vector<2x8xf32>
    %36 = arith.subf %32, %35 : vector<2x8xf32>
    %37 = arith.truncf %36 : vector<2x8xf32> to vector<2x8xbf16>
    %cst_18 = arith.constant dense<0.000000e+00> : vector<2x128xf32>
    %38 = tpu.matmul %34, %33, %cst_18 {dimension_numbers = #tpu.dot_dimension_numbers<[1], [0], [0], [1], [0, 0, 1, 1], [], []>} : vector<2x8xbf16>, vector<8x128xbf16>, vector<2x128xf32> -> vector<2x128xf32>
    %cst_19 = arith.constant dense<0.000000e+00> : vector<2x128xf32>
    %39 = tpu.matmul %37, %33, %cst_19 {dimension_numbers = #tpu.dot_dimension_numbers<[1], [0], [0], [1], [0, 0, 1, 1], [], []>} : vector<2x8xbf16>, vector<8x128xbf16>, vector<2x128xf32> -> vector<2x128xf32>
    %40 = arith.addf %38, %39 : vector<2x128xf32>
    %41 = vector.extract_strided_slice %6 {offsets = [1, 0], sizes = [1, 128], strides = [1, 1]} : vector<3x128xf32> to vector<1x128xf32>
    %42 = vector.extract_strided_slice %40 {offsets = [1, 0], sizes = [1, 128], strides = [1, 1]} : vector<2x128xf32> to vector<1x128xf32>
    %cst_20 = arith.constant 9.99999974E-6 : f32
    %43 = vector.broadcast %cst_20 : f32 to vector<1x128xf32>
    %44 = arith.addf %42, %43 : vector<1x128xf32>
    %45 = math.rsqrt %44 : vector<1x128xf32>
    %46 = arith.mulf %41, %45 : vector<1x128xf32>
    %47 = vector.extract_strided_slice %6 {offsets = [2, 0], sizes = [1, 128], strides = [1, 1]} : vector<3x128xf32> to vector<1x128xf32>
    %48 = vector.extract_strided_slice %40 {offsets = [0, 0], sizes = [1, 128], strides = [1, 1]} : vector<2x128xf32> to vector<1x128xf32>
    %49 = arith.mulf %48, %46 : vector<1x128xf32>
    %50 = arith.subf %47, %49 : vector<1x128xf32>
    %51 = vector.broadcast %46 : vector<1x128xf32> to vector<32x128xf32>
    %52 = arith.mulf %9, %51 : vector<32x128xf32>
    %53 = vector.broadcast %50 : vector<1x128xf32> to vector<32x128xf32>
    %54 = arith.addf %52, %53 : vector<32x128xf32>
    %cst_21 = arith.constant 0.000000e+00 : f32
    %55 = vector.broadcast %cst_21 : f32 to vector<32x128xf32>
    %56 = arith.maximumf %54, %55 : vector<32x128xf32>
    %57 = arith.truncf %56 : vector<32x128xf32> to vector<32x128xbf16>
    %cst_22 = arith.constant dense<0.000000e+00> : vector<32x128xf32>
    %58 = tpu.matmul %0, %57, %cst_22 {dimension_numbers = #tpu.dot_dimension_numbers<[1], [0], [0], [1], [0, 0, 1, 1], [], []>} : vector<32x32xbf16>, vector<32x128xbf16>, vector<32x128xf32> -> vector<32x128xf32>
    %c0_23 = arith.constant 0 : index
    %c0_24 = arith.constant 0 : index
    %59 = vector.load %arg6[%c0_23, %c0_24] : memref<128x128xbf16, #tpu.memory_space<vmem>>, vector<128x128xbf16>
    %60 = arith.truncf %58 : vector<32x128xf32> to vector<32x128xbf16>
    %cst_25 = arith.constant dense<0.000000e+00> : vector<32x128xf32>
    %61 = tpu.matmul %60, %59, %cst_25 {dimension_numbers = #tpu.dot_dimension_numbers<[1], [0], [0], [1], [0, 0, 1, 1], [], []>} : vector<32x128xbf16>, vector<128x128xbf16>, vector<32x128xf32> -> vector<32x128xf32>
    %c0_26 = arith.constant 0 : index
    %c0_27 = arith.constant 0 : index
    %62 = vector.load %arg9[%c0_26, %c0_27] : memref<3x128xf32, #tpu.memory_space<vmem>>, vector<3x128xf32>
    %63 = vector.extract_strided_slice %62 {offsets = [0, 0], sizes = [1, 128], strides = [1, 1]} : vector<3x128xf32> to vector<1x128xf32>
    %64 = vector.broadcast %63 : vector<1x128xf32> to vector<32x128xf32>
    %65 = arith.addf %61, %64 : vector<32x128xf32>
    %cst_28 = arith.constant dense<0.000000e+00> : vector<128xf32>
    %66 = vector.multi_reduction <add>, %65, %cst_28 [0] : vector<32x128xf32> to vector<128xf32>
    %67 = vector.shape_cast %66 : vector<128xf32> to vector<1x128xf32>
    %68 = arith.mulf %65, %65 : vector<32x128xf32>
    %cst_29 = arith.constant dense<0.000000e+00> : vector<128xf32>
    %69 = vector.multi_reduction <add>, %68, %cst_29 [0] : vector<32x128xf32> to vector<128xf32>
    %70 = vector.shape_cast %69 : vector<128xf32> to vector<1x128xf32>
    %71 = tpu.concatenate %67, %70 in 0 : vector<1x128xf32>, vector<1x128xf32> -> vector<2x128xf32>
    %c0_30 = arith.constant 0 : index
    %c0_31 = arith.constant 0 : index
    %72 = vector.load %arg7[%c0_30, %c0_31] : memref<128x8xbf16, #tpu.memory_space<vmem>>, vector<128x8xbf16>
    %73 = arith.truncf %71 : vector<2x128xf32> to vector<2x128xbf16>
    %74 = arith.extf %73 : vector<2x128xbf16> to vector<2x128xf32>
    %75 = arith.subf %71, %74 : vector<2x128xf32>
    %76 = arith.truncf %75 : vector<2x128xf32> to vector<2x128xbf16>
    %cst_32 = arith.constant dense<0.000000e+00> : vector<2x8xf32>
    %77 = tpu.matmul %73, %72, %cst_32 {dimension_numbers = #tpu.dot_dimension_numbers<[1], [0], [0], [1], [0, 0, 1, 1], [], []>} : vector<2x128xbf16>, vector<128x8xbf16>, vector<2x8xf32> -> vector<2x8xf32>
    %cst_33 = arith.constant dense<0.000000e+00> : vector<2x8xf32>
    %78 = tpu.matmul %76, %72, %cst_33 {dimension_numbers = #tpu.dot_dimension_numbers<[1], [0], [0], [1], [0, 0, 1, 1], [], []>} : vector<2x128xbf16>, vector<128x8xbf16>, vector<2x8xf32> -> vector<2x8xf32>
    %79 = arith.addf %77, %78 : vector<2x8xf32>
    %cst_34 = arith.constant 0.001953125 : f32
    %80 = vector.broadcast %cst_34 : f32 to vector<2x8xf32>
    %81 = arith.mulf %79, %80 : vector<2x8xf32>
    %82 = vector.extract_strided_slice %81 {offsets = [0, 0], sizes = [1, 8], strides = [1, 1]} : vector<2x8xf32> to vector<1x8xf32>
    %83 = vector.extract_strided_slice %81 {offsets = [1, 0], sizes = [1, 8], strides = [1, 1]} : vector<2x8xf32> to vector<1x8xf32>
    %84 = arith.mulf %82, %82 : vector<1x8xf32>
    %85 = arith.subf %83, %84 : vector<1x8xf32>
    %cst_35 = arith.constant 0.000000e+00 : f32
    %86 = vector.broadcast %cst_35 : f32 to vector<1x8xf32>
    %87 = arith.maximumf %85, %86 : vector<1x8xf32>
    %88 = tpu.concatenate %82, %87 in 0 : vector<1x8xf32>, vector<1x8xf32> -> vector<2x8xf32>
    %c0_36 = arith.constant 0 : index
    %c0_37 = arith.constant 0 : index
    %89 = vector.load %arg8[%c0_36, %c0_37] : memref<8x128xbf16, #tpu.memory_space<vmem>>, vector<8x128xbf16>
    %90 = arith.truncf %88 : vector<2x8xf32> to vector<2x8xbf16>
    %91 = arith.extf %90 : vector<2x8xbf16> to vector<2x8xf32>
    %92 = arith.subf %88, %91 : vector<2x8xf32>
    %93 = arith.truncf %92 : vector<2x8xf32> to vector<2x8xbf16>
    %cst_38 = arith.constant dense<0.000000e+00> : vector<2x128xf32>
    %94 = tpu.matmul %90, %89, %cst_38 {dimension_numbers = #tpu.dot_dimension_numbers<[1], [0], [0], [1], [0, 0, 1, 1], [], []>} : vector<2x8xbf16>, vector<8x128xbf16>, vector<2x128xf32> -> vector<2x128xf32>
    %cst_39 = arith.constant dense<0.000000e+00> : vector<2x128xf32>
    %95 = tpu.matmul %93, %89, %cst_39 {dimension_numbers = #tpu.dot_dimension_numbers<[1], [0], [0], [1], [0, 0, 1, 1], [], []>} : vector<2x8xbf16>, vector<8x128xbf16>, vector<2x128xf32> -> vector<2x128xf32>
    %96 = arith.addf %94, %95 : vector<2x128xf32>
    %97 = vector.extract_strided_slice %62 {offsets = [1, 0], sizes = [1, 128], strides = [1, 1]} : vector<3x128xf32> to vector<1x128xf32>
    %98 = vector.extract_strided_slice %96 {offsets = [1, 0], sizes = [1, 128], strides = [1, 1]} : vector<2x128xf32> to vector<1x128xf32>
    %cst_40 = arith.constant 9.99999974E-6 : f32
    %99 = vector.broadcast %cst_40 : f32 to vector<1x128xf32>
    %100 = arith.addf %98, %99 : vector<1x128xf32>
    %101 = math.rsqrt %100 : vector<1x128xf32>
    %102 = arith.mulf %97, %101 : vector<1x128xf32>
    %103 = vector.extract_strided_slice %62 {offsets = [2, 0], sizes = [1, 128], strides = [1, 1]} : vector<3x128xf32> to vector<1x128xf32>
    %104 = vector.extract_strided_slice %96 {offsets = [0, 0], sizes = [1, 128], strides = [1, 1]} : vector<2x128xf32> to vector<1x128xf32>
    %105 = arith.mulf %104, %102 : vector<1x128xf32>
    %106 = arith.subf %103, %105 : vector<1x128xf32>
    %107 = vector.broadcast %102 : vector<1x128xf32> to vector<32x128xf32>
    %108 = arith.mulf %65, %107 : vector<32x128xf32>
    %109 = vector.broadcast %106 : vector<1x128xf32> to vector<32x128xf32>
    %110 = arith.addf %108, %109 : vector<32x128xf32>
    %cst_41 = arith.constant 0.000000e+00 : f32
    %111 = vector.broadcast %cst_41 : f32 to vector<32x128xf32>
    %112 = arith.maximumf %110, %111 : vector<32x128xf32>
    %113 = arith.truncf %112 : vector<32x128xf32> to vector<32x128xbf16>
    %cst_42 = arith.constant dense<0.000000e+00> : vector<32x128xf32>
    %114 = tpu.matmul %0, %113, %cst_42 {dimension_numbers = #tpu.dot_dimension_numbers<[1], [0], [0], [1], [0, 0, 1, 1], [], []>} : vector<32x32xbf16>, vector<32x128xbf16>, vector<32x128xf32> -> vector<32x128xf32>
    %c0_43 = arith.constant 0 : index
    %c0_44 = arith.constant 0 : index
    %115 = vector.load %arg10[%c0_43, %c0_44] : memref<128x128xbf16, #tpu.memory_space<vmem>>, vector<128x128xbf16>
    %116 = arith.truncf %114 : vector<32x128xf32> to vector<32x128xbf16>
    %cst_45 = arith.constant dense<0.000000e+00> : vector<32x128xf32>
    %117 = tpu.matmul %116, %115, %cst_45 {dimension_numbers = #tpu.dot_dimension_numbers<[1], [0], [0], [1], [0, 0, 1, 1], [], []>} : vector<32x128xbf16>, vector<128x128xbf16>, vector<32x128xf32> -> vector<32x128xf32>
    %c0_46 = arith.constant 0 : index
    %c0_47 = arith.constant 0 : index
    %118 = vector.load %arg13[%c0_46, %c0_47] : memref<3x128xf32, #tpu.memory_space<vmem>>, vector<3x128xf32>
    %119 = vector.extract_strided_slice %118 {offsets = [0, 0], sizes = [1, 128], strides = [1, 1]} : vector<3x128xf32> to vector<1x128xf32>
    %120 = vector.broadcast %119 : vector<1x128xf32> to vector<32x128xf32>
    %121 = arith.addf %117, %120 : vector<32x128xf32>
    %cst_48 = arith.constant dense<0.000000e+00> : vector<128xf32>
    %122 = vector.multi_reduction <add>, %121, %cst_48 [0] : vector<32x128xf32> to vector<128xf32>
    %123 = vector.shape_cast %122 : vector<128xf32> to vector<1x128xf32>
    %124 = arith.mulf %121, %121 : vector<32x128xf32>
    %cst_49 = arith.constant dense<0.000000e+00> : vector<128xf32>
    %125 = vector.multi_reduction <add>, %124, %cst_49 [0] : vector<32x128xf32> to vector<128xf32>
    %126 = vector.shape_cast %125 : vector<128xf32> to vector<1x128xf32>
    %127 = tpu.concatenate %123, %126 in 0 : vector<1x128xf32>, vector<1x128xf32> -> vector<2x128xf32>
    %c0_50 = arith.constant 0 : index
    %c0_51 = arith.constant 0 : index
    %128 = vector.load %arg11[%c0_50, %c0_51] : memref<128x8xbf16, #tpu.memory_space<vmem>>, vector<128x8xbf16>
    %129 = arith.truncf %127 : vector<2x128xf32> to vector<2x128xbf16>
    %130 = arith.extf %129 : vector<2x128xbf16> to vector<2x128xf32>
    %131 = arith.subf %127, %130 : vector<2x128xf32>
    %132 = arith.truncf %131 : vector<2x128xf32> to vector<2x128xbf16>
    %cst_52 = arith.constant dense<0.000000e+00> : vector<2x8xf32>
    %133 = tpu.matmul %129, %128, %cst_52 {dimension_numbers = #tpu.dot_dimension_numbers<[1], [0], [0], [1], [0, 0, 1, 1], [], []>} : vector<2x128xbf16>, vector<128x8xbf16>, vector<2x8xf32> -> vector<2x8xf32>
    %cst_53 = arith.constant dense<0.000000e+00> : vector<2x8xf32>
    %134 = tpu.matmul %132, %128, %cst_53 {dimension_numbers = #tpu.dot_dimension_numbers<[1], [0], [0], [1], [0, 0, 1, 1], [], []>} : vector<2x128xbf16>, vector<128x8xbf16>, vector<2x8xf32> -> vector<2x8xf32>
    %135 = arith.addf %133, %134 : vector<2x8xf32>
    %cst_54 = arith.constant 0.001953125 : f32
    %136 = vector.broadcast %cst_54 : f32 to vector<2x8xf32>
    %137 = arith.mulf %135, %136 : vector<2x8xf32>
    %138 = vector.extract_strided_slice %137 {offsets = [0, 0], sizes = [1, 8], strides = [1, 1]} : vector<2x8xf32> to vector<1x8xf32>
    %139 = vector.extract_strided_slice %137 {offsets = [1, 0], sizes = [1, 8], strides = [1, 1]} : vector<2x8xf32> to vector<1x8xf32>
    %140 = arith.mulf %138, %138 : vector<1x8xf32>
    %141 = arith.subf %139, %140 : vector<1x8xf32>
    %cst_55 = arith.constant 0.000000e+00 : f32
    %142 = vector.broadcast %cst_55 : f32 to vector<1x8xf32>
    %143 = arith.maximumf %141, %142 : vector<1x8xf32>
    %144 = tpu.concatenate %138, %143 in 0 : vector<1x8xf32>, vector<1x8xf32> -> vector<2x8xf32>
    %c0_56 = arith.constant 0 : index
    %c0_57 = arith.constant 0 : index
    %145 = vector.load %arg12[%c0_56, %c0_57] : memref<8x128xbf16, #tpu.memory_space<vmem>>, vector<8x128xbf16>
    %146 = arith.truncf %144 : vector<2x8xf32> to vector<2x8xbf16>
    %147 = arith.extf %146 : vector<2x8xbf16> to vector<2x8xf32>
    %148 = arith.subf %144, %147 : vector<2x8xf32>
    %149 = arith.truncf %148 : vector<2x8xf32> to vector<2x8xbf16>
    %cst_58 = arith.constant dense<0.000000e+00> : vector<2x128xf32>
    %150 = tpu.matmul %146, %145, %cst_58 {dimension_numbers = #tpu.dot_dimension_numbers<[1], [0], [0], [1], [0, 0, 1, 1], [], []>} : vector<2x8xbf16>, vector<8x128xbf16>, vector<2x128xf32> -> vector<2x128xf32>
    %cst_59 = arith.constant dense<0.000000e+00> : vector<2x128xf32>
    %151 = tpu.matmul %149, %145, %cst_59 {dimension_numbers = #tpu.dot_dimension_numbers<[1], [0], [0], [1], [0, 0, 1, 1], [], []>} : vector<2x8xbf16>, vector<8x128xbf16>, vector<2x128xf32> -> vector<2x128xf32>
    %152 = arith.addf %150, %151 : vector<2x128xf32>
    %153 = vector.extract_strided_slice %118 {offsets = [1, 0], sizes = [1, 128], strides = [1, 1]} : vector<3x128xf32> to vector<1x128xf32>
    %154 = vector.extract_strided_slice %152 {offsets = [1, 0], sizes = [1, 128], strides = [1, 1]} : vector<2x128xf32> to vector<1x128xf32>
    %cst_60 = arith.constant 9.99999974E-6 : f32
    %155 = vector.broadcast %cst_60 : f32 to vector<1x128xf32>
    %156 = arith.addf %154, %155 : vector<1x128xf32>
    %157 = math.rsqrt %156 : vector<1x128xf32>
    %158 = arith.mulf %153, %157 : vector<1x128xf32>
    %159 = vector.extract_strided_slice %118 {offsets = [2, 0], sizes = [1, 128], strides = [1, 1]} : vector<3x128xf32> to vector<1x128xf32>
    %160 = vector.extract_strided_slice %152 {offsets = [0, 0], sizes = [1, 128], strides = [1, 1]} : vector<2x128xf32> to vector<1x128xf32>
    %161 = arith.mulf %160, %158 : vector<1x128xf32>
    %162 = arith.subf %159, %161 : vector<1x128xf32>
    %163 = vector.broadcast %158 : vector<1x128xf32> to vector<32x128xf32>
    %164 = arith.mulf %121, %163 : vector<32x128xf32>
    %165 = vector.broadcast %162 : vector<1x128xf32> to vector<32x128xf32>
    %166 = arith.addf %164, %165 : vector<32x128xf32>
    %cst_61 = arith.constant 0.000000e+00 : f32
    %167 = vector.broadcast %cst_61 : f32 to vector<32x128xf32>
    %168 = arith.maximumf %166, %167 : vector<32x128xf32>
    %c0_62 = arith.constant 0 : index
    %c0_63 = arith.constant 0 : index
    %169 = vector.load %arg14[%c0_62, %c0_63] : memref<128x128xbf16, #tpu.memory_space<vmem>>, vector<128x128xbf16>
    %170 = arith.truncf %168 : vector<32x128xf32> to vector<32x128xbf16>
    %cst_64 = arith.constant dense<0.000000e+00> : vector<32x128xf32>
    %171 = tpu.matmul %170, %169, %cst_64 {dimension_numbers = #tpu.dot_dimension_numbers<[1], [0], [0], [1], [0, 0, 1, 1], [], []>} : vector<32x128xbf16>, vector<128x128xbf16>, vector<32x128xf32> -> vector<32x128xf32>
    %c0_65 = arith.constant 0 : index
    %c0_66 = arith.constant 0 : index
    %172 = vector.load %arg15[%c0_65, %c0_66] : memref<1x128xf32, #tpu.memory_space<vmem>>, vector<1x128xf32>
    %173 = vector.broadcast %172 : vector<1x128xf32> to vector<32x128xf32>
    %174 = arith.addf %171, %173 : vector<32x128xf32>
    %c0_67 = arith.constant 0 : index
    %c0_68 = arith.constant 0 : index
    %175 = vector.load %arg16[%c0_67, %c0_68] : memref<32x128xf32, #tpu.memory_space<vmem>>, vector<32x128xf32>
    tpu.vector_store %arg16[%c0_67, %c0_68], %174 {strides = array<i32>} : memref<32x128xf32, #tpu.memory_space<vmem>>, vector<32x128xf32>,
    return
  }
}

</mosaic_0001>

<llo_original>
// kernel: _apply.1
$region0: #{_apply.1}
  #allocation0 [shape = 'u32[]', space=smem, size = 0x4, offset = 0x4, fixed_abs, tag = 'smem constant byte address 0x4 - core index']
  #allocation1 [shape = 'u32[144,128]{1,0:T(1,128)}', space=vmem, size = 0x12000, scoped, tag = 'internal scratch']
  %s0 = inlined_call_operand.vmem [shape: bf16[32,32], index: 0, kind: input, shape index: {}]
  %s1 = inlined_call_operand.vmem [shape: bf16[32,128], index: 1, kind: input, shape index: {}]
  %s2 = inlined_call_operand.vmem [shape: bf16[128,128], index: 2, kind: input, shape index: {}]
  %s3 = inlined_call_operand.vmem [shape: bf16[128,8], index: 3, kind: input, shape index: {}]
  %s4 = inlined_call_operand.vmem [shape: bf16[8,128], index: 4, kind: input, shape index: {}]
  %s5 = inlined_call_operand.vmem [shape: f32[3,128], index: 5, kind: input, shape index: {}]
  %s6 = inlined_call_operand.vmem [shape: bf16[128,128], index: 6, kind: input, shape index: {}]
  %s7 = inlined_call_operand.vmem [shape: bf16[128,8], index: 7, kind: input, shape index: {}]
  %s8 = inlined_call_operand.vmem [shape: bf16[8,128], index: 8, kind: input, shape index: {}]
  %s9 = inlined_call_operand.vmem [shape: f32[3,128], index: 9, kind: input, shape index: {}]
  %s10 = inlined_call_operand.vmem [shape: bf16[128,128], index: 10, kind: input, shape index: {}]
  %s11 = inlined_call_operand.vmem [shape: bf16[128,8], index: 11, kind: input, shape index: {}]
  %s12 = inlined_call_operand.vmem [shape: bf16[8,128], index: 12, kind: input, shape index: {}]
  %s13 = inlined_call_operand.vmem [shape: f32[3,128], index: 13, kind: input, shape index: {}]
  %s14 = inlined_call_operand.vmem [shape: bf16[128,128], index: 14, kind: input, shape index: {}]
  %s15 = inlined_call_operand.vmem [shape: f32[1,128], index: 15, kind: input, shape index: {}]
  %s16 = inlined_call_operand.vmem [shape: f32[32,128], index: 16, kind: output, shape index: {}]
  %s17 = sld [smem:[#allocation0]]
  $region74: #{_apply.1} parent=0
    _
  %s19 = ssub.s32 1, %s17
  %s20 = scalar_select 0, %s19, %s17
  // Predicated region
  $region2: #{_apply.1} parent=0 // pred_check
    _
  $region3: #{_apply.1} parent=0 // pred_check_branch
    %22 = sbr.rel (0) target = $region5
  $region4: #{_apply.1} parent=0 // pred_region
    _
  $region5: #{_apply.1} parent=0 // pred_fallthru
    _
  // Predicated region
  $region6: #{_apply.1} parent=0 // pred_check
    _
  $region7: #{_apply.1} parent=0 // pred_check_branch
    %24 = sbr.rel (0) target = $region9
  $region8: #{_apply.1} parent=0 // pred_region
    _
  $region9: #{_apply.1} parent=0 // pred_fallthru
    _
  // Predicated region
  $region10: #{_apply.1} parent=0 // pred_check
    _
  $region11: #{_apply.1} parent=0 // pred_check_branch
    %26 = sbr.rel (0) target = $region13
  $region12: #{_apply.1} parent=0 // pred_region
    _
  $region13: #{_apply.1} parent=0 // pred_fallthru
    _
  // Predicated region
  $region14: #{_apply.1} parent=0 // pred_check
    _
  $region15: #{_apply.1} parent=0 // pred_check_branch
    %28 = sbr.rel (0) target = $region17
  $region16: #{_apply.1} parent=0 // pred_region
    _
  $region17: #{_apply.1} parent=0 // pred_fallthru
    _
  // Predicated region
  $region18: #{_apply.1} parent=0 // pred_check
    _
  $region19: #{_apply.1} parent=0 // pred_check_branch
    %30 = sbr.rel (0) target = $region21
  $region20: #{_apply.1} parent=0 // pred_region
    _
  $region21: #{_apply.1} parent=0 // pred_fallthru
    _
  // Predicated region
  $region22: #{_apply.1} parent=0 // pred_check
    _
  $region23: #{_apply.1} parent=0 // pred_check_branch
    %32 = sbr.rel (0) target = $region25
  $region24: #{_apply.1} parent=0 // pred_region
    _
  $region25: #{_apply.1} parent=0 // pred_fallthru
    _
  // Predicated region
  $region26: #{_apply.1} parent=0 // pred_check
    _
  $region27: #{_apply.1} parent=0 // pred_check_branch
    %34 = sbr.rel (0) target = $region29
  $region28: #{_apply.1} parent=0 // pred_region
    _
  $region29: #{_apply.1} parent=0 // pred_fallthru
    _
  // Predicated region
  $region30: #{_apply.1} parent=0 // pred_check
    _
  $region31: #{_apply.1} parent=0 // pred_check_branch
    %36 = sbr.rel (0) target = $region33
  $region32: #{_apply.1} parent=0 // pred_region
    _
  $region33: #{_apply.1} parent=0 // pred_fallthru
    _
  // Predicated region
  $region34: #{_apply.1} parent=0 // pred_check
    _
  $region35: #{_apply.1} parent=0 // pred_check_branch
    %38 = sbr.rel (0) target = $region37
  $region36: #{_apply.1} parent=0 // pred_region
    _
  $region37: #{_apply.1} parent=0 // pred_fallthru
    _
  // Predicated region
  $region38: #{_apply.1} parent=0 // pred_check
    _
  $region39: #{_apply.1} parent=0 // pred_check_branch
    %40 = sbr.rel (0) target = $region41
  $region40: #{_apply.1} parent=0 // pred_region
    _
  $region41: #{_apply.1} parent=0 // pred_fallthru
    _
  // Predicated region
  $region42: #{_apply.1} parent=0 // pred_check
    _
  $region43: #{_apply.1} parent=0 // pred_check_branch
    %42 = sbr.rel (0) target = $region45
  $region44: #{_apply.1} parent=0 // pred_region
    _
  $region45: #{_apply.1} parent=0 // pred_fallthru
    _
  // Predicated region
  $region46: #{_apply.1} parent=0 // pred_check
    _
  $region47: #{_apply.1} parent=0 // pred_check_branch
    %44 = sbr.rel (0) target = $region49
  $region48: #{_apply.1} parent=0 // pred_region
    _
  $region49: #{_apply.1} parent=0 // pred_fallthru
    _
  // Predicated region
  $region50: #{_apply.1} parent=0 // pred_check
    _
  $region51: #{_apply.1} parent=0 // pred_check_branch
    %46 = sbr.rel (0) target = $region53
  $region52: #{_apply.1} parent=0 // pred_region
    _
  $region53: #{_apply.1} parent=0 // pred_fallthru
    _
  // Predicated region
  $region54: #{_apply.1} parent=0 // pred_check
    _
  $region55: #{_apply.1} parent=0 // pred_check_branch
    %48 = sbr.rel (0) target = $region57
  $region56: #{_apply.1} parent=0 // pred_region
    _
  $region57: #{_apply.1} parent=0 // pred_fallthru
    _
  // Predicated region
  $region58: #{_apply.1} parent=0 // pred_check
    _
  $region59: #{_apply.1} parent=0 // pred_check_branch
    %50 = sbr.rel (0) target = $region61
  $region60: #{_apply.1} parent=0 // pred_region
    _
  $region61: #{_apply.1} parent=0 // pred_fallthru
    _
  // Predicated region
  $region62: #{_apply.1} parent=0 // pred_check
    _
  $region63: #{_apply.1} parent=0 // pred_check_branch
    %52 = sbr.rel (0) target = $region65
  $region64: #{_apply.1} parent=0 // pred_region
    _
  $region65: #{_apply.1} parent=0 // pred_fallthru
    _
  %v54 = vld [vmem:[%s0] sm:$0xf]
  %v55 = vld [vmem:[%s0 + $0x4] sm:$0xf]
  %v56 = vld [vmem:[%s0 + $0x8] sm:$0xf]
  %v57 = vld [vmem:[%s0 + $0xc] sm:$0xf]
  %v58 = vld [vmem:[%s1] sm:$0xf]
  %v59 = vld [vmem:[%s1 + $0x4] sm:$0xf]
  %v60 = vld [vmem:[%s1 + $0x8] sm:$0xf]
  %v61 = vld [vmem:[%s1 + $0xc] sm:$0xf]
  %v66 = vunpack.c.l.b16 %v54
  %v67 = vunpack.c.l.b16 %v55
  %v68 = vunpack.c.l.b16 %v56
  %v69 = vunpack.c.l.b16 %v57
  %v70 = vpack.c.b16 %v67, %v66
  %v71 = vpack.c.b16 %v69, %v68
  %v76 = vunpack.c.l.b16 %v58
  %v77 = vunpack.c.l.b16 %v59
  %v78 = vunpack.c.l.b16 %v60
  %v79 = vunpack.c.l.b16 %v61
  %v80 = vpack.c.b16 %v77, %v76
  %v81 = vpack.c.b16 %v79, %v78
  %vm84 = vcmask 261120
  %v86 = vsel %vm84, %v70, 0
  %v89 = vsel %vm84, %v71, 0
  %91 = vmatprep.subr.bf16.mxu0 0
  %92 = vmatpush1.bf16.msra.mxu0 %v80
  %93 = vmatprep.subr.bf16.mxu0 0
  %94 = vmatpush1.bf16.msra.mxu0 %v81
  %95 = vmatprep.subr.bf16.mxu0 0
  %96 = vmatpush1.bf16.msra.mxu0 0
  %97 = vmatprep.subr.bf16.mxu0 0
  %98 = vmatpush1.bf16.msra.mxu0 0
  %99 = vmatprep.subr.bf16.mxu0 0
  %100 = vmatpush1.bf16.msra.mxu0 0
  %101 = vmatprep.subr.bf16.mxu0 0
  %102 = vmatpush1.bf16.msra.mxu0 0
  %103 = vmatprep.subr.bf16.mxu0 0
  %104 = vmatpush1.bf16.msra.mxu0 0
  %105 = vmatprep.subr.bf16.mxu0 0
  %106 = vmatpush1.bf16.msra.mxu0 0
  %107 = vmatprep.subr.bf16.mxu0 0
  %108 = vmatpush1.bf16.msra.mxu0 0
  %109 = vmatprep.subr.bf16.mxu0 0
  %110 = vmatpush1.bf16.msra.mxu0 0
  %111 = vmatprep.subr.bf16.mxu0 0
  %112 = vmatpush1.bf16.msra.mxu0 0
  %113 = vmatprep.subr.bf16.mxu0 0
  %114 = vmatpush1.bf16.msra.mxu0 0
  %115 = vmatprep.subr.bf16.mxu0 0
  %116 = vmatpush1.bf16.msra.mxu0 0
  %117 = vmatprep.subr.bf16.mxu0 0
  %118 = vmatpush1.bf16.msra.mxu0 0
  %119 = vmatprep.subr.bf16.mxu0 0
  %120 = vmatpush1.bf16.msra.mxu0 0
  %121 = vmatprep.subr.bf16.mxu0 0
  %122 = vmatpush1.bf16.msra.mxu0 0
  %123 = vmatprep.mubr.bf16.mxu0 0
  %124 = vmatmul.mubr.bf16.gmra.mrb[0].mxu0 %v86
  %v125 = vpop.f32.mrb[0].mxu0
  %v126 = vadd.f32 0.0, %v125
  %v127 = vpop.f32.mrb[0].mxu0
  %v128 = vpop.f32.mrb[0].mxu0
  %v129 = vadd.f32 0.0, %v128
  %v130 = vpop.f32.mrb[0].mxu0
  %131 = vmatprep.mubr.bf16.mxu0 0
  %132 = vmatmul.mubr.bf16.gmra.mrb[0].mxu0 %v89
  %v133 = vpop.f32.mrb[0].mxu0
  %v134 = vadd.f32 0.0, %v133
  %v135 = vpop.f32.mrb[0].mxu0
  %v136 = vpop.f32.mrb[0].mxu0
  %v137 = vadd.f32 0.0, %v136
  %v138 = vpop.f32.mrb[0].mxu0
  %139 = vdwg.mxu0
  %v140 = vld [vmem:[%s2] sm:$0xf]
  %v141 = vld [vmem:[%s2 + $0x4] sm:$0xf]
  %v142 = vld [vmem:[%s2 + $0x8] sm:$0xf]
  %v143 = vld [vmem:[%s2 + $0xc] sm:$0xf]
  %v144 = vld [vmem:[%s2 + $0x10] sm:$0xf]
  %v145 = vld [vmem:[%s2 + $0x14] sm:$0xf]
  %v146 = vld [vmem:[%s2 + $0x18] sm:$0xf]
  %v147 = vld [vmem:[%s2 + $0x1c] sm:$0xf]
  %v148 = vld [vmem:[%s2 + $0x20] sm:$0xf]
  %v149 = vld [vmem:[%s2 + $0x24] sm:$0xf]
  %v150 = vld [vmem:[%s2 + $0x28] sm:$0xf]
  %v151 = vld [vmem:[%s2 + $0x2c] sm:$0xf]
  %v152 = vld [vmem:[%s2 + $0x30] sm:$0xf]
  %v153 = vld [vmem:[%s2 + $0x34] sm:$0xf]
  %v154 = vld [vmem:[%s2 + $0x38] sm:$0xf]
  %v155 = vld [vmem:[%s2 + $0x3c] sm:$0xf]
  %v156 = vpack.c.bf16 %v129, %v126
  %v157 = vpack.c.bf16 %v137, %v134
  %v158 = vld [vmem:[%s5] sm:$0x7]
  %v159 = vlaneseq
  %v160 = vshrl.u32 %v159, 7
  %v161 = vsub.s32 0, %v160
  %v162 = vrot.slane %v158, %v161
  %v179 = vunpack.c.l.b16 %v140
  %v180 = vunpack.c.l.b16 %v141
  %v181 = vunpack.c.l.b16 %v142
  %v182 = vunpack.c.l.b16 %v143
  %v183 = vunpack.c.l.b16 %v144
  %v184 = vunpack.c.l.b16 %v145
  %v185 = vunpack.c.l.b16 %v146
  %v186 = vunpack.c.l.b16 %v147
  %v187 = vunpack.c.l.b16 %v148
  %v188 = vunpack.c.l.b16 %v149
  %v189 = vunpack.c.l.b16 %v150
  %v190 = vunpack.c.l.b16 %v151
  %v191 = vunpack.c.l.b16 %v152
  %v192 = vunpack.c.l.b16 %v153
  %v193 = vunpack.c.l.b16 %v154
  %v194 = vunpack.c.l.b16 %v155
  %v195 = vpack.c.b16 %v180, %v179
  %v196 = vpack.c.b16 %v182, %v181
  %v197 = vpack.c.b16 %v184, %v183
  %v198 = vpack.c.b16 %v186, %v185
  %v199 = vpack.c.b16 %v188, %v187
  %v200 = vpack.c.b16 %v190, %v189
  %v201 = vpack.c.b16 %v192, %v191
  %v202 = vpack.c.b16 %v194, %v193
  %211 = vmatprep.subr.bf16.mxu0 0
  %212 = vmatpush1.bf16.msra.mxu0 %v195
  %213 = vmatprep.subr.bf16.mxu0 0
  %214 = vmatpush1.bf16.msra.mxu0 %v196
  %215 = vmatprep.subr.bf16.mxu0 0
  %216 = vmatpush1.bf16.msra.mxu0 %v197
  %217 = vmatprep.subr.bf16.mxu0 0
  %218 = vmatpush1.bf16.msra.mxu0 %v198
  %219 = vmatprep.subr.bf16.mxu0 0
  %220 = vmatpush1.bf16.msra.mxu0 %v199
  %221 = vmatprep.subr.bf16.mxu0 0
  %222 = vmatpush1.bf16.msra.mxu0 %v200
  %223 = vmatprep.subr.bf16.mxu0 0
  %224 = vmatpush1.bf16.msra.mxu0 %v201
  %225 = vmatprep.subr.bf16.mxu0 0
  %226 = vmatpush1.bf16.msra.mxu0 %v202
  %227 = vmatprep.subr.bf16.mxu0 0
  %228 = vmatpush1.bf16.msra.mxu0 0
  %229 = vmatprep.subr.bf16.mxu0 0
  %230 = vmatpush1.bf16.msra.mxu0 0
  %231 = vmatprep.subr.bf16.mxu0 0
  %232 = vmatpush1.bf16.msra.mxu0 0
  %233 = vmatprep.subr.bf16.mxu0 0
  %234 = vmatpush1.bf16.msra.mxu0 0
  %235 = vmatprep.subr.bf16.mxu0 0
  %236 = vmatpush1.bf16.msra.mxu0 0
  %237 = vmatprep.subr.bf16.mxu0 0
  %238 = vmatpush1.bf16.msra.mxu0 0
  %239 = vmatprep.subr.bf16.mxu0 0
  %240 = vmatpush1.bf16.msra.mxu0 0
  %241 = vmatprep.subr.bf16.mxu0 0
  %242 = vmatpush1.bf16.msra.mxu0 0
  %243 = vmatprep.mubr.bf16.mxu0 0
  %244 = vmatmul.mubr.bf16.gmra.mrb[0].mxu0 %v156
  %v245 = vpop.f32.mrb[0].mxu0
  %v246 = vadd.f32 %v162, %v245
  %v247 = vpop.f32.mrb[0].mxu0
  %v248 = vpop.f32.mrb[0].mxu0
  %v249 = vadd.f32 %v162, %v248
  %v250 = vpop.f32.mrb[0].mxu0
  %251 = vmatprep.mubr.bf16.mxu0 0
  %252 = vmatmul.mubr.bf16.gmra.mrb[0].mxu0 %v157
  %v253 = vpop.f32.mrb[0].mxu0
  %v254 = vadd.f32 %v162, %v253
  %v255 = vpop.f32.mrb[0].mxu0
  %v256 = vpop.f32.mrb[0].mxu0
  %v257 = vadd.f32 %v162, %v256
  %v258 = vpop.f32.mrb[0].mxu0
  %259 = vdwg.mxu0
  %v260 = vadd.f32 %v246, %v249
  %v261 = vadd.f32 %v260, %v254
  %v262 = vadd.f32 %v261, %v257
  %v263 = vrot.slane %v262, 4
  %v264 = vadd.f32 %v262, %v263
  %v265 = vrot.slane %v264, 2
  %v266 = vadd.f32 %v264, %v265
  %v267 = vrot.slane %v266, 1
  %v268 = vadd.f32 %v266, %v267
  %v269 = vmul.f32 %v246, %v246
  %v270 = vmul.f32 %v249, %v249
  %v271 = vmul.f32 %v254, %v254
  %v272 = vmul.f32 %v257, %v257
  %v273 = vadd.f32 %v269, %v270
  %v274 = vadd.f32 %v273, %v271
  %v275 = vadd.f32 %v274, %v272
  %v276 = vrot.slane %v275, 4
  %v277 = vadd.f32 %v275, %v276
  %v278 = vrot.slane %v277, 2
  %v279 = vadd.f32 %v277, %v278
  %v280 = vrot.slane %v279, 1
  %v281 = vadd.f32 %v279, %v280
  %vm282 = vcmask 1040384
  %v283 = vsel %vm282, %v268, %v281
  %v284 = vld [vmem:[%s3] sm:$0xf]
  %v285 = vld [vmem:[%s3 + $0x4] sm:$0xf]
  %v286 = vld [vmem:[%s3 + $0x8] sm:$0xf]
  %v287 = vld [vmem:[%s3 + $0xc] sm:$0xf]
  %v288 = vld [vmem:[%s3 + $0x10] sm:$0xf]
  %v289 = vld [vmem:[%s3 + $0x14] sm:$0xf]
  %v290 = vld [vmem:[%s3 + $0x18] sm:$0xf]
  %v291 = vld [vmem:[%s3 + $0x1c] sm:$0xf]
  %v292 = vld [vmem:[%s3 + $0x20] sm:$0xf]
  %v293 = vld [vmem:[%s3 + $0x24] sm:$0xf]
  %v294 = vld [vmem:[%s3 + $0x28] sm:$0xf]
  %v295 = vld [vmem:[%s3 + $0x2c] sm:$0xf]
  %v296 = vld [vmem:[%s3 + $0x30] sm:$0xf]
  %v297 = vld [vmem:[%s3 + $0x34] sm:$0xf]
  %v298 = vld [vmem:[%s3 + $0x38] sm:$0xf]
  %v299 = vld [vmem:[%s3 + $0x3c] sm:$0xf]
  %v300 = vpack.c.bf16 %v283, %v283
  %v301 = vunpack.c.l.bf16 %v300
  %v302 = vsub.f32 %v283, %v301
  %v303 = vpack.c.bf16 %v302, %v302
  %v320 = vunpack.c.l.b16 %v284
  %v321 = vunpack.c.l.b16 %v285
  %v322 = vunpack.c.l.b16 %v286
  %v323 = vunpack.c.l.b16 %v287
  %v324 = vunpack.c.l.b16 %v288
  %v325 = vunpack.c.l.b16 %v289
  %v326 = vunpack.c.l.b16 %v290
  %v327 = vunpack.c.l.b16 %v291
  %v328 = vunpack.c.l.b16 %v292
  %v329 = vunpack.c.l.b16 %v293
  %v330 = vunpack.c.l.b16 %v294
  %v331 = vunpack.c.l.b16 %v295
  %v332 = vunpack.c.l.b16 %v296
  %v333 = vunpack.c.l.b16 %v297
  %v334 = vunpack.c.l.b16 %v298
  %v335 = vunpack.c.l.b16 %v299
  %v336 = vpack.c.b16 %v321, %v320
  %v337 = vpack.c.b16 %v323, %v322
  %v338 = vpack.c.b16 %v325, %v324
  %v339 = vpack.c.b16 %v327, %v326
  %v340 = vpack.c.b16 %v329, %v328
  %v341 = vpack.c.b16 %v331, %v330
  %v342 = vpack.c.b16 %v333, %v332
  %v343 = vpack.c.b16 %v335, %v334
  %352 = vmatprep.subr.bf16.mxu0 0
  %353 = vmatpush1.bf16.msra.mxu0 %v336
  %354 = vmatprep.subr.bf16.mxu0 0
  %355 = vmatpush1.bf16.msra.mxu0 %v337
  %356 = vmatprep.subr.bf16.mxu0 0
  %357 = vmatpush1.bf16.msra.mxu0 %v338
  %358 = vmatprep.subr.bf16.mxu0 0
  %359 = vmatpush1.bf16.msra.mxu0 %v339
  %360 = vmatprep.subr.bf16.mxu0 0
  %361 = vmatpush1.bf16.msra.mxu0 %v340
  %362 = vmatprep.subr.bf16.mxu0 0
  %363 = vmatpush1.bf16.msra.mxu0 %v341
  %364 = vmatprep.subr.bf16.mxu0 0
  %365 = vmatpush1.bf16.msra.mxu0 %v342
  %366 = vmatprep.subr.bf16.mxu0 0
  %367 = vmatpush1.bf16.msra.mxu0 %v343
  %368 = vmatprep.subr.bf16.mxu0 0
  %369 = vmatpush1.bf16.msra.mxu0 0
  %370 = vmatprep.subr.bf16.mxu0 0
  %371 = vmatpush1.bf16.msra.mxu0 0
  %372 = vmatprep.subr.bf16.mxu0 0
  %373 = vmatpush1.bf16.msra.mxu0 0
  %374 = vmatprep.subr.bf16.mxu0 0
  %375 = vmatpush1.bf16.msra.mxu0 0
  %376 = vmatprep.subr.bf16.mxu0 0
  %377 = vmatpush1.bf16.msra.mxu0 0
  %378 = vmatprep.subr.bf16.mxu0 0
  %379 = vmatpush1.bf16.msra.mxu0 0
  %380 = vmatprep.subr.bf16.mxu0 0
  %381 = vmatpush1.bf16.msra.mxu0 0
  %382 = vmatprep.subr.bf16.mxu0 0
  %383 = vmatpush1.bf16.msra.mxu0 0
  %384 = vmatprep.mubr.bf16.mxu0 0
  %385 = vmatmul.mubr.bf16.gmra.mrb[0].mxu0 %v303
  %v386 = vpop.f32.mrb[0].mxu0
  %v387 = vadd.f32 0.0, %v386
  %v388 = vpop.f32.mrb[0].mxu0
  %v389 = vpop.f32.mrb[0].mxu0
  %v390 = vpop.f32.mrb[0].mxu0
  %391 = vdwg.mxu0
  %392 = vmatprep.subr.bf16.mxu0 0
  %393 = vmatpush1.bf16.msra.mxu0 %v336
  %394 = vmatprep.subr.bf16.mxu0 0
  %395 = vmatpush1.bf16.msra.mxu0 %v337
  %396 = vmatprep.subr.bf16.mxu0 0
  %397 = vmatpush1.bf16.msra.mxu0 %v338
  %398 = vmatprep.subr.bf16.mxu0 0
  %399 = vmatpush1.bf16.msra.mxu0 %v339
  %400 = vmatprep.subr.bf16.mxu0 0
  %401 = vmatpush1.bf16.msra.mxu0 %v340
  %402 = vmatprep.subr.bf16.mxu0 0
  %403 = vmatpush1.bf16.msra.mxu0 %v341
  %404 = vmatprep.subr.bf16.mxu0 0
  %405 = vmatpush1.bf16.msra.mxu0 %v342
  %406 = vmatprep.subr.bf16.mxu0 0
  %407 = vmatpush1.bf16.msra.mxu0 %v343
  %408 = vmatprep.subr.bf16.mxu0 0
  %409 = vmatpush1.bf16.msra.mxu0 0
  %410 = vmatprep.subr.bf16.mxu0 0
  %411 = vmatpush1.bf16.msra.mxu0 0
  %412 = vmatprep.subr.bf16.mxu0 0
  %413 = vmatpush1.bf16.msra.mxu0 0
  %414 = vmatprep.subr.bf16.mxu0 0
  %415 = vmatpush1.bf16.msra.mxu0 0
  %416 = vmatprep.subr.bf16.mxu0 0
  %417 = vmatpush1.bf16.msra.mxu0 0
  %418 = vmatprep.subr.bf16.mxu0 0
  %419 = vmatpush1.bf16.msra.mxu0 0
  %420 = vmatprep.subr.bf16.mxu0 0
  %421 = vmatpush1.bf16.msra.mxu0 0
  %422 = vmatprep.subr.bf16.mxu0 0
  %423 = vmatpush1.bf16.msra.mxu0 0
  %424 = vmatprep.mubr.bf16.mxu0 0
  %425 = vmatmul.mubr.bf16.gmra.mrb[0].mxu0 %v300
  %v426 = vpop.f32.mrb[0].mxu0
  %v427 = vadd.f32 %v387, %v426
  %v428 = vpop.f32.mrb[0].mxu0
  %v429 = vpop.f32.mrb[0].mxu0
  %v430 = vpop.f32.mrb[0].mxu0
  %431 = vdwg.mxu0
  %v432 = vmul.f32 %v427, 0.001953125
  %v433 = vmul.f32 %v432, %v432
  %v435 = vrot.slane %v433, 7
  %v437 = vsub.f32 %v432, %v435
  %v438 = vmax.f32 %v437, 0.0
  %v439 = vsel %vm282, %v432, %v438
  %v440 = vld [vmem:[%s4] sm:$0xf]
  %v441 = vpack.c.bf16 %v439, %v439
  %v442 = vunpack.c.l.bf16 %v441
  %v443 = vsub.f32 %v439, %v442
  %v444 = vpack.c.bf16 %v443, %v443
  %vm445 = vcmask 64512
  %v447 = vsel %vm445, %v444, 0
  %vm449 = vcmask 1043456
  %v451 = vsel %vm449, %v440, 0
  %453 = vmatprep.subr.bf16.mxu0 0
  %454 = vmatpush1.bf16.msra.mxu0 %v451
  %455 = vmatprep.subr.bf16.mxu0 0
  %456 = vmatpush1.bf16.msra.mxu0 0
  %457 = vmatprep.subr.bf16.mxu0 0
  %458 = vmatpush1.bf16.msra.mxu0 0
  %459 = vmatprep.subr.bf16.mxu0 0
  %460 = vmatpush1.bf16.msra.mxu0 0
  %461 = vmatprep.subr.bf16.mxu0 0
  %462 = vmatpush1.bf16.msra.mxu0 0
  %463 = vmatprep.subr.bf16.mxu0 0
  %464 = vmatpush1.bf16.msra.mxu0 0
  %465 = vmatprep.subr.bf16.mxu0 0
  %466 = vmatpush1.bf16.msra.mxu0 0
  %467 = vmatprep.subr.bf16.mxu0 0
  %468 = vmatpush1.bf16.msra.mxu0 0
  %469 = vmatprep.subr.bf16.mxu0 0
  %470 = vmatpush1.bf16.msra.mxu0 0
  %471 = vmatprep.subr.bf16.mxu0 0
  %472 = vmatpush1.bf16.msra.mxu0 0
  %473 = vmatprep.subr.bf16.mxu0 0
  %474 = vmatpush1.bf16.msra.mxu0 0
  %475 = vmatprep.subr.bf16.mxu0 0
  %476 = vmatpush1.bf16.msra.mxu0 0
  %477 = vmatprep.subr.bf16.mxu0 0
  %478 = vmatpush1.bf16.msra.mxu0 0
  %479 = vmatprep.subr.bf16.mxu0 0
  %480 = vmatpush1.bf16.msra.mxu0 0
  %481 = vmatprep.subr.bf16.mxu0 0
  %482 = vmatpush1.bf16.msra.mxu0 0
  %483 = vmatprep.subr.bf16.mxu0 0
  %484 = vmatpush1.bf16.msra.mxu0 0
  %485 = vmatprep.mubr.bf16.mxu0 0
  %486 = vmatmul.mubr.bf16.gmra.mrb[0].mxu0 %v447
  %v487 = vpop.f32.mrb[0].mxu0
  %v488 = vadd.f32 0.0, %v487
  %v489 = vpop.f32.mrb[0].mxu0
  %v490 = vpop.f32.mrb[0].mxu0
  %v491 = vpop.f32.mrb[0].mxu0
  %492 = vdwg.mxu0
  %v494 = vsel %vm445, %v441, 0
  %496 = vmatprep.subr.bf16.mxu0 0
  %497 = vmatpush1.bf16.msra.mxu0 %v451
  %498 = vmatprep.subr.bf16.mxu0 0
  %499 = vmatpush1.bf16.msra.mxu0 0
  %500 = vmatprep.subr.bf16.mxu0 0
  %501 = vmatpush1.bf16.msra.mxu0 0
  %502 = vmatprep.subr.bf16.mxu0 0
  %503 = vmatpush1.bf16.msra.mxu0 0
  %504 = vmatprep.subr.bf16.mxu0 0
  %505 = vmatpush1.bf16.msra.mxu0 0
  %506 = vmatprep.subr.bf16.mxu0 0
  %507 = vmatpush1.bf16.msra.mxu0 0
  %508 = vmatprep.subr.bf16.mxu0 0
  %509 = vmatpush1.bf16.msra.mxu0 0
  %510 = vmatprep.subr.bf16.mxu0 0
  %511 = vmatpush1.bf16.msra.mxu0 0
  %512 = vmatprep.subr.bf16.mxu0 0
  %513 = vmatpush1.bf16.msra.mxu0 0
  %514 = vmatprep.subr.bf16.mxu0 0
  %515 = vmatpush1.bf16.msra.mxu0 0
  %516 = vmatprep.subr.bf16.mxu0 0
  %517 = vmatpush1.bf16.msra.mxu0 0
  %518 = vmatprep.subr.bf16.mxu0 0
  %519 = vmatpush1.bf16.msra.mxu0 0
  %520 = vmatprep.subr.bf16.mxu0 0
  %521 = vmatpush1.bf16.msra.mxu0 0
  %522 = vmatprep.subr.bf16.mxu0 0
  %523 = vmatpush1.bf16.msra.mxu0 0
  %524 = vmatprep.subr.bf16.mxu0 0
  %525 = vmatpush1.bf16.msra.mxu0 0
  %526 = vmatprep.subr.bf16.mxu0 0
  %527 = vmatpush1.bf16.msra.mxu0 0
  %528 = vmatprep.mubr.bf16.mxu0 0
  %529 = vmatmul.mubr.bf16.gmra.mrb[0].mxu0 %v494
  %v530 = vpop.f32.mrb[0].mxu0
  %v531 = vadd.f32 %v488, %v530
  %v532 = vpop.f32.mrb[0].mxu0
  %v533 = vpop.f32.mrb[0].mxu0
  %v534 = vpop.f32.mrb[0].mxu0
  %535 = vdwg.mxu0
  %v536 = vadd.f32 %v531, 1e-05
  %v537 = vrsqrt.pop %v536
  %v538 = vmul.f32 %v158, %v537
  %v540 = vrot.slane %v538, 1
  %v542 = vmul.f32 %v531, %v540
  %v544 = vrot.slane %v542, 6
  %v546 = vsub.f32 %v158, %v544
  %v547 = vlaneseq
  %v548 = vshrl.u32 %v547, 7
  %v549 = vsub.s32 1, %v548
  %v550 = vrot.slane %v538, %v549
  %v551 = vmul.f32 %v246, %v550
  %v552 = vmul.f32 %v249, %v550
  %v553 = vmul.f32 %v254, %v550
  %v554 = vmul.f32 %v257, %v550
  %v555 = vlaneseq
  %v556 = vshrl.u32 %v555, 7
  %v557 = vsub.s32 2, %v556
  %v558 = vrot.slane %v546, %v557
  %v559 = vadd.f32 %v551, %v558
  %v560 = vadd.f32 %v552, %v558
  %v561 = vadd.f32 %v553, %v558
  %v562 = vadd.f32 %v554, %v558
  %v563 = vmax.f32 %v559, 0.0
  %v564 = vmax.f32 %v560, 0.0
  %v565 = vmax.f32 %v561, 0.0
  %v566 = vmax.f32 %v562, 0.0
  %v567 = vpack.c.bf16 %v564, %v563
  %v568 = vpack.c.bf16 %v566, %v565
  %569 = vmatprep.subr.bf16.mxu0 0
  %570 = vmatpush1.bf16.msra.mxu0 %v567
  %571 = vmatprep.subr.bf16.mxu0 0
  %572 = vmatpush1.bf16.msra.mxu0 %v568
  %573 = vmatprep.subr.bf16.mxu0 0
  %574 = vmatpush1.bf16.msra.mxu0 0
  %575 = vmatprep.subr.bf16.mxu0 0
  %576 = vmatpush1.bf16.msra.mxu0 0
  %577 = vmatprep.subr.bf16.mxu0 0
  %578 = vmatpush1.bf16.msra.mxu0 0
  %579 = vmatprep.subr.bf16.mxu0 0
  %580 = vmatpush1.bf16.msra.mxu0 0
  %581 = vmatprep.subr.bf16.mxu0 0
  %582 = vmatpush1.bf16.msra.mxu0 0
  %583 = vmatprep.subr.bf16.mxu0 0
  %584 = vmatpush1.bf16.msra.mxu0 0
  %585 = vmatprep.subr.bf16.mxu0 0
  %586 = vmatpush1.bf16.msra.mxu0 0
  %587 = vmatprep.subr.bf16.mxu0 0
  %588 = vmatpush1.bf16.msra.mxu0 0
  %589 = vmatprep.subr.bf16.mxu0 0
  %590 = vmatpush1.bf16.msra.mxu0 0
  %591 = vmatprep.subr.bf16.mxu0 0
  %592 = vmatpush1.bf16.msra.mxu0 0
  %593 = vmatprep.subr.bf16.mxu0 0
  %594 = vmatpush1.bf16.msra.mxu0 0
  %595 = vmatprep.subr.bf16.mxu0 0
  %596 = vmatpush1.bf16.msra.mxu0 0
  %597 = vmatprep.subr.bf16.mxu0 0
  %598 = vmatpush1.bf16.msra.mxu0 0
  %599 = vmatprep.subr.bf16.mxu0 0
  %600 = vmatpush1.bf16.msra.mxu0 0
  %601 = vmatprep.mubr.bf16.mxu0 0
  %602 = vmatmul.mubr.bf16.gmra.mrb[0].mxu0 %v86
  %v603 = vpop.f32.mrb[0].mxu0
  %v604 = vadd.f32 0.0, %v603
  %v605 = vpop.f32.mrb[0].mxu0
  %v606 = vpop.f32.mrb[0].mxu0
  %v607 = vadd.f32 0.0, %v606
  %v608 = vpop.f32.mrb[0].mxu0
  %609 = vmatprep.mubr.bf16.mxu0 0
  %610 = vmatmul.mubr.bf16.gmra.mrb[0].mxu0 %v89
  %v611 = vpop.f32.mrb[0].mxu0
  %v612 = vadd.f32 0.0, %v611
  %v613 = vpop.f32.mrb[0].mxu0
  %v614 = vpop.f32.mrb[0].mxu0
  %v615 = vadd.f32 0.0, %v614
  %v616 = vpop.f32.mrb[0].mxu0
  %617 = vdwg.mxu0
  %v618 = vld [vmem:[%s6] sm:$0xf]
  %v619 = vld [vmem:[%s6 + $0x4] sm:$0xf]
  %v620 = vld [vmem:[%s6 + $0x8] sm:$0xf]
  %v621 = vld [vmem:[%s6 + $0xc] sm:$0xf]
  %v622 = vld [vmem:[%s6 + $0x10] sm:$0xf]
  %v623 = vld [vmem:[%s6 + $0x14] sm:$0xf]
  %v624 = vld [vmem:[%s6 + $0x18] sm:$0xf]
  %v625 = vld [vmem:[%s6 + $0x1c] sm:$0xf]
  %v626 = vld [vmem:[%s6 + $0x20] sm:$0xf]
  %v627 = vld [vmem:[%s6 + $0x24] sm:$0xf]
  %v628 = vld [vmem:[%s6 + $0x28] sm:$0xf]
  %v629 = vld [vmem:[%s6 + $0x2c] sm:$0xf]
  %v630 = vld [vmem:[%s6 + $0x30] sm:$0xf]
  %v631 = vld [vmem:[%s6 + $0x34] sm:$0xf]
  %v632 = vld [vmem:[%s6 + $0x38] sm:$0xf]
  %v633 = vld [vmem:[%s6 + $0x3c] sm:$0xf]
  %v634 = vpack.c.bf16 %v607, %v604
  %v635 = vpack.c.bf16 %v615, %v612
  %v636 = vld [vmem:[%s9] sm:$0x7]
  %v637 = vlaneseq
  %v638 = vshrl.u32 %v637, 7
  %v639 = vsub.s32 0, %v638
  %v640 = vrot.slane %v636, %v639
  %v657 = vunpack.c.l.b16 %v618
  %v658 = vunpack.c.l.b16 %v619
  %v659 = vunpack.c.l.b16 %v620
  %v660 = vunpack.c.l.b16 %v621
  %v661 = vunpack.c.l.b16 %v622
  %v662 = vunpack.c.l.b16 %v623
  %v663 = vunpack.c.l.b16 %v624
  %v664 = vunpack.c.l.b16 %v625
  %v665 = vunpack.c.l.b16 %v626
  %v666 = vunpack.c.l.b16 %v627
  %v667 = vunpack.c.l.b16 %v628
  %v668 = vunpack.c.l.b16 %v629
  %v669 = vunpack.c.l.b16 %v630
  %v670 = vunpack.c.l.b16 %v631
  %v671 = vunpack.c.l.b16 %v632
  %v672 = vunpack.c.l.b16 %v633
  %v673 = vpack.c.b16 %v658, %v657
  %v674 = vpack.c.b16 %v660, %v659
  %v675 = vpack.c.b16 %v662, %v661
  %v676 = vpack.c.b16 %v664, %v663
  %v677 = vpack.c.b16 %v666, %v665
  %v678 = vpack.c.b16 %v668, %v667
  %v679 = vpack.c.b16 %v670, %v669
  %v680 = vpack.c.b16 %v672, %v671
  %689 = vmatprep.subr.bf16.mxu0 0
  %690 = vmatpush1.bf16.msra.mxu0 %v673
  %691 = vmatprep.subr.bf16.mxu0 0
  %692 = vmatpush1.bf16.msra.mxu0 %v674
  %693 = vmatprep.subr.bf16.mxu0 0
  %694 = vmatpush1.bf16.msra.mxu0 %v675
  %695 = vmatprep.subr.bf16.mxu0 0
  %696 = vmatpush1.bf16.msra.mxu0 %v676
  %697 = vmatprep.subr.bf16.mxu0 0
  %698 = vmatpush1.bf16.msra.mxu0 %v677
  %699 = vmatprep.subr.bf16.mxu0 0
  %700 = vmatpush1.bf16.msra.mxu0 %v678
  %701 = vmatprep.subr.bf16.mxu0 0
  %702 = vmatpush1.bf16.msra.mxu0 %v679
  %703 = vmatprep.subr.bf16.mxu0 0
  %704 = vmatpush1.bf16.msra.mxu0 %v680
  %705 = vmatprep.subr.bf16.mxu0 0
  %706 = vmatpush1.bf16.msra.mxu0 0
  %707 = vmatprep.subr.bf16.mxu0 0
  %708 = vmatpush1.bf16.msra.mxu0 0
  %709 = vmatprep.subr.bf16.mxu0 0
  %710 = vmatpush1.bf16.msra.mxu0 0
  %711 = vmatprep.subr.bf16.mxu0 0
  %712 = vmatpush1.bf16.msra.mxu0 0
  %713 = vmatprep.subr.bf16.mxu0 0
  %714 = vmatpush1.bf16.msra.mxu0 0
  %715 = vmatprep.subr.bf16.mxu0 0
  %716 = vmatpush1.bf16.msra.mxu0 0
  %717 = vmatprep.subr.bf16.mxu0 0
  %718 = vmatpush1.bf16.msra.mxu0 0
  %719 = vmatprep.subr.bf16.mxu0 0
  %720 = vmatpush1.bf16.msra.mxu0 0
  %721 = vmatprep.mubr.bf16.mxu0 0
  %722 = vmatmul.mubr.bf16.gmra.mrb[0].mxu0 %v634
  %v723 = vpop.f32.mrb[0].mxu0
  %v724 = vadd.f32 %v640, %v723
  %v725 = vpop.f32.mrb[0].mxu0
  %v726 = vpop.f32.mrb[0].mxu0
  %v727 = vadd.f32 %v640, %v726
  %v728 = vpop.f32.mrb[0].mxu0
  %729 = vmatprep.mubr.bf16.mxu0 0
  %730 = vmatmul.mubr.bf16.gmra.mrb[0].mxu0 %v635
  %v731 = vpop.f32.mrb[0].mxu0
  %v732 = vadd.f32 %v640, %v731
  %v733 = vpop.f32.mrb[0].mxu0
  %v734 = vpop.f32.mrb[0].mxu0
  %v735 = vadd.f32 %v640, %v734
  %v736 = vpop.f32.mrb[0].mxu0
  %737 = vdwg.mxu0
  %v738 = vadd.f32 %v724, %v727
  %v739 = vadd.f32 %v738, %v732
  %v740 = vadd.f32 %v739, %v735
  %v741 = vrot.slane %v740, 4
  %v742 = vadd.f32 %v740, %v741
  %v743 = vrot.slane %v742, 2
  %v744 = vadd.f32 %v742, %v743
  %v745 = vrot.slane %v744, 1
  %v746 = vadd.f32 %v744, %v745
  %v747 = vmul.f32 %v724, %v724
  %v748 = vmul.f32 %v727, %v727
  %v749 = vmul.f32 %v732, %v732
  %v750 = vmul.f32 %v735, %v735
  %v751 = vadd.f32 %v747, %v748
  %v752 = vadd.f32 %v751, %v749
  %v753 = vadd.f32 %v752, %v750
  %v754 = vrot.slane %v753, 4
  %v755 = vadd.f32 %v753, %v754
  %v756 = vrot.slane %v755, 2
  %v757 = vadd.f32 %v755, %v756
  %v758 = vrot.slane %v757, 1
  %v759 = vadd.f32 %v757, %v758
  %v760 = vsel %vm282, %v746, %v759
  %v761 = vld [vmem:[%s7] sm:$0xf]
  %v762 = vld [vmem:[%s7 + $0x4] sm:$0xf]
  %v763 = vld [vmem:[%s7 + $0x8] sm:$0xf]
  %v764 = vld [vmem:[%s7 + $0xc] sm:$0xf]
  %v765 = vld [vmem:[%s7 + $0x10] sm:$0xf]
  %v766 = vld [vmem:[%s7 + $0x14] sm:$0xf]
  %v767 = vld [vmem:[%s7 + $0x18] sm:$0xf]
  %v768 = vld [vmem:[%s7 + $0x1c] sm:$0xf]
  %v769 = vld [vmem:[%s7 + $0x20] sm:$0xf]
  %v770 = vld [vmem:[%s7 + $0x24] sm:$0xf]
  %v771 = vld [vmem:[%s7 + $0x28] sm:$0xf]
  %v772 = vld [vmem:[%s7 + $0x2c] sm:$0xf]
  %v773 = vld [vmem:[%s7 + $0x30] sm:$0xf]
  %v774 = vld [vmem:[%s7 + $0x34] sm:$0xf]
  %v775 = vld [vmem:[%s7 + $0x38] sm:$0xf]
  %v776 = vld [vmem:[%s7 + $0x3c] sm:$0xf]
  %v777 = vpack.c.bf16 %v760, %v760
  %v778 = vunpack.c.l.bf16 %v777
  %v779 = vsub.f32 %v760, %v778
  %v780 = vpack.c.bf16 %v779, %v779
  %v797 = vunpack.c.l.b16 %v761
  %v798 = vunpack.c.l.b16 %v762
  %v799 = vunpack.c.l.b16 %v763
  %v800 = vunpack.c.l.b16 %v764
  %v801 = vunpack.c.l.b16 %v765
  %v802 = vunpack.c.l.b16 %v766
  %v803 = vunpack.c.l.b16 %v767
  %v804 = vunpack.c.l.b16 %v768
  %v805 = vunpack.c.l.b16 %v769
  %v806 = vunpack.c.l.b16 %v770
  %v807 = vunpack.c.l.b16 %v771
  %v808 = vunpack.c.l.b16 %v772
  %v809 = vunpack.c.l.b16 %v773
  %v810 = vunpack.c.l.b16 %v774
  %v811 = vunpack.c.l.b16 %v775
  %v812 = vunpack.c.l.b16 %v776
  %v813 = vpack.c.b16 %v798, %v797
  %v814 = vpack.c.b16 %v800, %v799
  %v815 = vpack.c.b16 %v802, %v801
  %v816 = vpack.c.b16 %v804, %v803
  %v817 = vpack.c.b16 %v806, %v805
  %v818 = vpack.c.b16 %v808, %v807
  %v819 = vpack.c.b16 %v810, %v809
  %v820 = vpack.c.b16 %v812, %v811
  %829 = vmatprep.subr.bf16.mxu0 0
  %830 = vmatpush1.bf16.msra.mxu0 %v813
  %831 = vmatprep.subr.bf16.mxu0 0
  %832 = vmatpush1.bf16.msra.mxu0 %v814
  %833 = vmatprep.subr.bf16.mxu0 0
  %834 = vmatpush1.bf16.msra.mxu0 %v815
  %835 = vmatprep.subr.bf16.mxu0 0
  %836 = vmatpush1.bf16.msra.mxu0 %v816
  %837 = vmatprep.subr.bf16.mxu0 0
  %838 = vmatpush1.bf16.msra.mxu0 %v817
  %839 = vmatprep.subr.bf16.mxu0 0
  %840 = vmatpush1.bf16.msra.mxu0 %v818
  %841 = vmatprep.subr.bf16.mxu0 0
  %842 = vmatpush1.bf16.msra.mxu0 %v819
  %843 = vmatprep.subr.bf16.mxu0 0
  %844 = vmatpush1.bf16.msra.mxu0 %v820
  %845 = vmatprep.subr.bf16.mxu0 0
  %846 = vmatpush1.bf16.msra.mxu0 0
  %847 = vmatprep.subr.bf16.mxu0 0
  %848 = vmatpush1.bf16.msra.mxu0 0
  %849 = vmatprep.subr.bf16.mxu0 0
  %850 = vmatpush1.bf16.msra.mxu0 0
  %851 = vmatprep.subr.bf16.mxu0 0
  %852 = vmatpush1.bf16.msra.mxu0 0
  %853 = vmatprep.subr.bf16.mxu0 0
  %854 = vmatpush1.bf16.msra.mxu0 0
  %855 = vmatprep.subr.bf16.mxu0 0
  %856 = vmatpush1.bf16.msra.mxu0 0
  %857 = vmatprep.subr.bf16.mxu0 0
  %858 = vmatpush1.bf16.msra.mxu0 0
  %859 = vmatprep.subr.bf16.mxu0 0
  %860 = vmatpush1.bf16.msra.mxu0 0
  %861 = vmatprep.mubr.bf16.mxu0 0
  %862 = vmatmul.mubr.bf16.gmra.mrb[0].mxu0 %v780
  %v863 = vpop.f32.mrb[0].mxu0
  %v864 = vadd.f32 0.0, %v863
  %v865 = vpop.f32.mrb[0].mxu0
  %v866 = vpop.f32.mrb[0].mxu0
  %v867 = vpop.f32.mrb[0].mxu0
  %868 = vdwg.mxu0
  %869 = vmatprep.subr.bf16.mxu0 0
  %870 = vmatpush1.bf16.msra.mxu0 %v813
  %871 = vmatprep.subr.bf16.mxu0 0
  %872 = vmatpush1.bf16.msra.mxu0 %v814
  %873 = vmatprep.subr.bf16.mxu0 0
  %874 = vmatpush1.bf16.msra.mxu0 %v815
  %875 = vmatprep.subr.bf16.mxu0 0
  %876 = vmatpush1.bf16.msra.mxu0 %v816
  %877 = vmatprep.subr.bf16.mxu0 0
  %878 = vmatpush1.bf16.msra.mxu0 %v817
  %879 = vmatprep.subr.bf16.mxu0 0
  %880 = vmatpush1.bf16.msra.mxu0 %v818
  %881 = vmatprep.subr.bf16.mxu0 0
  %882 = vmatpush1.bf16.msra.mxu0 %v819
  %883 = vmatprep.subr.bf16.mxu0 0
  %884 = vmatpush1.bf16.msra.mxu0 %v820
  %885 = vmatprep.subr.bf16.mxu0 0
  %886 = vmatpush1.bf16.msra.mxu0 0
  %887 = vmatprep.subr.bf16.mxu0 0
  %888 = vmatpush1.bf16.msra.mxu0 0
  %889 = vmatprep.subr.bf16.mxu0 0
  %890 = vmatpush1.bf16.msra.mxu0 0
  %891 = vmatprep.subr.bf16.mxu0 0
  %892 = vmatpush1.bf16.msra.mxu0 0
  %893 = vmatprep.subr.bf16.mxu0 0
  %894 = vmatpush1.bf16.msra.mxu0 0
  %895 = vmatprep.subr.bf16.mxu0 0
  %896 = vmatpush1.bf16.msra.mxu0 0
  %897 = vmatprep.subr.bf16.mxu0 0
  %898 = vmatpush1.bf16.msra.mxu0 0
  %899 = vmatprep.subr.bf16.mxu0 0
  %900 = vmatpush1.bf16.msra.mxu0 0
  %901 = vmatprep.mubr.bf16.mxu0 0
  %902 = vmatmul.mubr.bf16.gmra.mrb[0].mxu0 %v777
  %v903 = vpop.f32.mrb[0].mxu0
  %v904 = vadd.f32 %v864, %v903
  %v905 = vpop.f32.mrb[0].mxu0
  %v906 = vpop.f32.mrb[0].mxu0
  %v907 = vpop.f32.mrb[0].mxu0
  %908 = vdwg.mxu0
  %v909 = vmul.f32 %v904, 0.001953125
  %v910 = vmul.f32 %v909, %v909
  %v912 = vrot.slane %v910, 7
  %v914 = vsub.f32 %v909, %v912
  %v915 = vmax.f32 %v914, 0.0
  %v916 = vsel %vm282, %v909, %v915
  %v917 = vld [vmem:[%s8] sm:$0xf]
  %v918 = vpack.c.bf16 %v916, %v916
  %v919 = vunpack.c.l.bf16 %v918
  %v920 = vsub.f32 %v916, %v919
  %v921 = vpack.c.bf16 %v920, %v920
  %v923 = vsel %vm445, %v921, 0
  %v926 = vsel %vm449, %v917, 0
  %928 = vmatprep.subr.bf16.mxu0 0
  %929 = vmatpush1.bf16.msra.mxu0 %v926
  %930 = vmatprep.subr.bf16.mxu0 0
  %931 = vmatpush1.bf16.msra.mxu0 0
  %932 = vmatprep.subr.bf16.mxu0 0
  %933 = vmatpush1.bf16.msra.mxu0 0
  %934 = vmatprep.subr.bf16.mxu0 0
  %935 = vmatpush1.bf16.msra.mxu0 0
  %936 = vmatprep.subr.bf16.mxu0 0
  %937 = vmatpush1.bf16.msra.mxu0 0
  %938 = vmatprep.subr.bf16.mxu0 0
  %939 = vmatpush1.bf16.msra.mxu0 0
  %940 = vmatprep.subr.bf16.mxu0 0
  %941 = vmatpush1.bf16.msra.mxu0 0
  %942 = vmatprep.subr.bf16.mxu0 0
  %943 = vmatpush1.bf16.msra.mxu0 0
  %944 = vmatprep.subr.bf16.mxu0 0
  %945 = vmatpush1.bf16.msra.mxu0 0
  %946 = vmatprep.subr.bf16.mxu0 0
  %947 = vmatpush1.bf16.msra.mxu0 0
  %948 = vmatprep.subr.bf16.mxu0 0
  %949 = vmatpush1.bf16.msra.mxu0 0
  %950 = vmatprep.subr.bf16.mxu0 0
  %951 = vmatpush1.bf16.msra.mxu0 0
  %952 = vmatprep.subr.bf16.mxu0 0
  %953 = vmatpush1.bf16.msra.mxu0 0
  %954 = vmatprep.subr.bf16.mxu0 0
  %955 = vmatpush1.bf16.msra.mxu0 0
  %956 = vmatprep.subr.bf16.mxu0 0
  %957 = vmatpush1.bf16.msra.mxu0 0
  %958 = vmatprep.subr.bf16.mxu0 0
  %959 = vmatpush1.bf16.msra.mxu0 0
  %960 = vmatprep.mubr.bf16.mxu0 0
  %961 = vmatmul.mubr.bf16.gmra.mrb[0].mxu0 %v923
  %v962 = vpop.f32.mrb[0].mxu0
  %v963 = vadd.f32 0.0, %v962
  %v964 = vpop.f32.mrb[0].mxu0
  %v965 = vpop.f32.mrb[0].mxu0
  %v966 = vpop.f32.mrb[0].mxu0
  %967 = vdwg.mxu0
  %v969 = vsel %vm445, %v918, 0
  %971 = vmatprep.subr.bf16.mxu0 0
  %972 = vmatpush1.bf16.msra.mxu0 %v926
  %973 = vmatprep.subr.bf16.mxu0 0
  %974 = vmatpush1.bf16.msra.mxu0 0
  %975 = vmatprep.subr.bf16.mxu0 0
  %976 = vmatpush1.bf16.msra.mxu0 0
  %977 = vmatprep.subr.bf16.mxu0 0
  %978 = vmatpush1.bf16.msra.mxu0 0
  %979 = vmatprep.subr.bf16.mxu0 0
  %980 = vmatpush1.bf16.msra.mxu0 0
  %981 = vmatprep.subr.bf16.mxu0 0
  %982 = vmatpush1.bf16.msra.mxu0 0
  %983 = vmatprep.subr.bf16.mxu0 0
  %984 = vmatpush1.bf16.msra.mxu0 0
  %985 = vmatprep.subr.bf16.mxu0 0
  %986 = vmatpush1.bf16.msra.mxu0 0
  %987 = vmatprep.subr.bf16.mxu0 0
  %988 = vmatpush1.bf16.msra.mxu0 0
  %989 = vmatprep.subr.bf16.mxu0 0
  %990 = vmatpush1.bf16.msra.mxu0 0
  %991 = vmatprep.subr.bf16.mxu0 0
  %992 = vmatpush1.bf16.msra.mxu0 0
  %993 = vmatprep.subr.bf16.mxu0 0
  %994 = vmatpush1.bf16.msra.mxu0 0
  %995 = vmatprep.subr.bf16.mxu0 0
  %996 = vmatpush1.bf16.msra.mxu0 0
  %997 = vmatprep.subr.bf16.mxu0 0
  %998 = vmatpush1.bf16.msra.mxu0 0
  %999 = vmatprep.subr.bf16.mxu0 0
  %1000 = vmatpush1.bf16.msra.mxu0 0
  %1001 = vmatprep.subr.bf16.mxu0 0
  %1002 = vmatpush1.bf16.msra.mxu0 0
  %1003 = vmatprep.mubr.bf16.mxu0 0
  %1004 = vmatmul.mubr.bf16.gmra.mrb[0].mxu0 %v969
  %v1005 = vpop.f32.mrb[0].mxu0
  %v1006 = vadd.f32 %v963, %v1005
  %v1007 = vpop.f32.mrb[0].mxu0
  %v1008 = vpop.f32.mrb[0].mxu0
  %v1009 = vpop.f32.mrb[0].mxu0
  %1010 = vdwg.mxu0
  %v1011 = vadd.f32 %v1006, 1e-05
  %v1012 = vrsqrt.pop %v1011
  %v1013 = vmul.f32 %v636, %v1012
  %v1015 = vrot.slane %v1013, 1
  %v1017 = vmul.f32 %v1006, %v1015
  %v1019 = vrot.slane %v1017, 6
  %v1021 = vsub.f32 %v636, %v1019
  %v1022 = vlaneseq
  %v1023 = vshrl.u32 %v1022, 7
  %v1024 = vsub.s32 1, %v1023
  %v1025 = vrot.slane %v1013, %v1024
  %v1026 = vmul.f32 %v724, %v1025
  %v1027 = vmul.f32 %v727, %v1025
  %v1028 = vmul.f32 %v732, %v1025
  %v1029 = vmul.f32 %v735, %v1025
  %v1030 = vlaneseq
  %v1031 = vshrl.u32 %v1030, 7
  %v1032 = vsub.s32 2, %v1031
  %v1033 = vrot.slane %v1021, %v1032
  %v1034 = vadd.f32 %v1026, %v1033
  %v1035 = vadd.f32 %v1027, %v1033
  %v1036 = vadd.f32 %v1028, %v1033
  %v1037 = vadd.f32 %v1029, %v1033
  %v1038 = vmax.f32 %v1034, 0.0
  %v1039 = vmax.f32 %v1035, 0.0
  %v1040 = vmax.f32 %v1036, 0.0
  %v1041 = vmax.f32 %v1037, 0.0
  %v1042 = vpack.c.bf16 %v1039, %v1038
  %v1043 = vpack.c.bf16 %v1041, %v1040
  %1044 = vmatprep.subr.bf16.mxu0 0
  %1045 = vmatpush1.bf16.msra.mxu0 %v1042
  %1046 = vmatprep.subr.bf16.mxu0 0
  %1047 = vmatpush1.bf16.msra.mxu0 %v1043
  %1048 = vmatprep.subr.bf16.mxu0 0
  %1049 = vmatpush1.bf16.msra.mxu0 0
  %1050 = vmatprep.subr.bf16.mxu0 0
  %1051 = vmatpush1.bf16.msra.mxu0 0
  %1052 = vmatprep.subr.bf16.mxu0 0
  %1053 = vmatpush1.bf16.msra.mxu0 0
  %1054 = vmatprep.subr.bf16.mxu0 0
  %1055 = vmatpush1.bf16.msra.mxu0 0
  %1056 = vmatprep.subr.bf16.mxu0 0
  %1057 = vmatpush1.bf16.msra.mxu0 0
  %1058 = vmatprep.subr.bf16.mxu0 0
  %1059 = vmatpush1.bf16.msra.mxu0 0
  %1060 = vmatprep.subr.bf16.mxu0 0
  %1061 = vmatpush1.bf16.msra.mxu0 0
  %1062 = vmatprep.subr.bf16.mxu0 0
  %1063 = vmatpush1.bf16.msra.mxu0 0
  %1064 = vmatprep.subr.bf16.mxu0 0
  %1065 = vmatpush1.bf16.msra.mxu0 0
  %1066 = vmatprep.subr.bf16.mxu0 0
  %1067 = vmatpush1.bf16.msra.mxu0 0
  %1068 = vmatprep.subr.bf16.mxu0 0
  %1069 = vmatpush1.bf16.msra.mxu0 0
  %1070 = vmatprep.subr.bf16.mxu0 0
  %1071 = vmatpush1.bf16.msra.mxu0 0
  %1072 = vmatprep.subr.bf16.mxu0 0
  %1073 = vmatpush1.bf16.msra.mxu0 0
  %1074 = vmatprep.subr.bf16.mxu0 0
  %1075 = vmatpush1.bf16.msra.mxu0 0
  %1076 = vmatprep.mubr.bf16.mxu0 0
  %1077 = vmatmul.mubr.bf16.gmra.mrb[0].mxu0 %v86
  %v1078 = vpop.f32.mrb[0].mxu0
  %v1079 = vadd.f32 0.0, %v1078
  %v1080 = vpop.f32.mrb[0].mxu0
  %v1081 = vpop.f32.mrb[0].mxu0
  %v1082 = vadd.f32 0.0, %v1081
  %v1083 = vpop.f32.mrb[0].mxu0
  %1084 = vmatprep.mubr.bf16.mxu0 0
  %1085 = vmatmul.mubr.bf16.gmra.mrb[0].mxu0 %v89
  %v1086 = vpop.f32.mrb[0].mxu0
  %v1087 = vadd.f32 0.0, %v1086
  %v1088 = vpop.f32.mrb[0].mxu0
  %v1089 = vpop.f32.mrb[0].mxu0
  %v1090 = vadd.f32 0.0, %v1089
  %v1091 = vpop.f32.mrb[0].mxu0
  %1092 = vdwg.mxu0
  %v1093 = vld [vmem:[%s10] sm:$0xf]
  %v1094 = vld [vmem:[%s10 + $0x4] sm:$0xf]
  %v1095 = vld [vmem:[%s10 + $0x8] sm:$0xf]
  %v1096 = vld [vmem:[%s10 + $0xc] sm:$0xf]
  %v1097 = vld [vmem:[%s10 + $0x10] sm:$0xf]
  %v1098 = vld [vmem:[%s10 + $0x14] sm:$0xf]
  %v1099 = vld [vmem:[%s10 + $0x18] sm:$0xf]
  %v1100 = vld [vmem:[%s10 + $0x1c] sm:$0xf]
  %v1101 = vld [vmem:[%s10 + $0x20] sm:$0xf]
  %v1102 = vld [vmem:[%s10 + $0x24] sm:$0xf]
  %v1103 = vld [vmem:[%s10 + $0x28] sm:$0xf]
  %v1104 = vld [vmem:[%s10 + $0x2c] sm:$0xf]
  %v1105 = vld [vmem:[%s10 + $0x30] sm:$0xf]
  %v1106 = vld [vmem:[%s10 + $0x34] sm:$0xf]
  %v1107 = vld [vmem:[%s10 + $0x38] sm:$0xf]
  %v1108 = vld [vmem:[%s10 + $0x3c] sm:$0xf]
  %v1109 = vpack.c.bf16 %v1082, %v1079
  %v1110 = vpack.c.bf16 %v1090, %v1087
  %v1111 = vld [vmem:[%s13] sm:$0x7]
  %v1112 = vlaneseq
  %v1113 = vshrl.u32 %v1112, 7
  %v1114 = vsub.s32 0, %v1113
  %v1115 = vrot.slane %v1111, %v1114
  %v1132 = vunpack.c.l.b16 %v1093
  %v1133 = vunpack.c.l.b16 %v1094
  %v1134 = vunpack.c.l.b16 %v1095
  %v1135 = vunpack.c.l.b16 %v1096
  %v1136 = vunpack.c.l.b16 %v1097
  %v1137 = vunpack.c.l.b16 %v1098
  %v1138 = vunpack.c.l.b16 %v1099
  %v1139 = vunpack.c.l.b16 %v1100
  %v1140 = vunpack.c.l.b16 %v1101
  %v1141 = vunpack.c.l.b16 %v1102
  %v1142 = vunpack.c.l.b16 %v1103
  %v1143 = vunpack.c.l.b16 %v1104
  %v1144 = vunpack.c.l.b16 %v1105
  %v1145 = vunpack.c.l.b16 %v1106
  %v1146 = vunpack.c.l.b16 %v1107
  %v1147 = vunpack.c.l.b16 %v1108
  %v1148 = vpack.c.b16 %v1133, %v1132
  %v1149 = vpack.c.b16 %v1135, %v1134
  %v1150 = vpack.c.b16 %v1137, %v1136
  %v1151 = vpack.c.b16 %v1139, %v1138
  %v1152 = vpack.c.b16 %v1141, %v1140
  %v1153 = vpack.c.b16 %v1143, %v1142
  %v1154 = vpack.c.b16 %v1145, %v1144
  %v1155 = vpack.c.b16 %v1147, %v1146
  %1164 = vmatprep.subr.bf16.mxu0 0
  %1165 = vmatpush1.bf16.msra.mxu0 %v1148
  %1166 = vmatprep.subr.bf16.mxu0 0
  %1167 = vmatpush1.bf16.msra.mxu0 %v1149
  %1168 = vmatprep.subr.bf16.mxu0 0
  %1169 = vmatpush1.bf16.msra.mxu0 %v1150
  %1170 = vmatprep.subr.bf16.mxu0 0
  %1171 = vmatpush1.bf16.msra.mxu0 %v1151
  %1172 = vmatprep.subr.bf16.mxu0 0
  %1173 = vmatpush1.bf16.msra.mxu0 %v1152
  %1174 = vmatprep.subr.bf16.mxu0 0
  %1175 = vmatpush1.bf16.msra.mxu0 %v1153
  %1176 = vmatprep.subr.bf16.mxu0 0
  %1177 = vmatpush1.bf16.msra.mxu0 %v1154
  %1178 = vmatprep.subr.bf16.mxu0 0
  %1179 = vmatpush1.bf16.msra.mxu0 %v1155
  %1180 = vmatprep.subr.bf16.mxu0 0
  %1181 = vmatpush1.bf16.msra.mxu0 0
  %1182 = vmatprep.subr.bf16.mxu0 0
  %1183 = vmatpush1.bf16.msra.mxu0 0
  %1184 = vmatprep.subr.bf16.mxu0 0
  %1185 = vmatpush1.bf16.msra.mxu0 0
  %1186 = vmatprep.subr.bf16.mxu0 0
  %1187 = vmatpush1.bf16.msra.mxu0 0
  %1188 = vmatprep.subr.bf16.mxu0 0
  %1189 = vmatpush1.bf16.msra.mxu0 0
  %1190 = vmatprep.subr.bf16.mxu0 0
  %1191 = vmatpush1.bf16.msra.mxu0 0
  %1192 = vmatprep.subr.bf16.mxu0 0
  %1193 = vmatpush1.bf16.msra.mxu0 0
  %1194 = vmatprep.subr.bf16.mxu0 0
  %1195 = vmatpush1.bf16.msra.mxu0 0
  %1196 = vmatprep.mubr.bf16.mxu0 0
  %1197 = vmatmul.mubr.bf16.gmra.mrb[0].mxu0 %v1109
  %v1198 = vpop.f32.mrb[0].mxu0
  %v1199 = vadd.f32 %v1115, %v1198
  %v1200 = vpop.f32.mrb[0].mxu0
  %v1201 = vpop.f32.mrb[0].mxu0
  %v1202 = vadd.f32 %v1115, %v1201
  %v1203 = vpop.f32.mrb[0].mxu0
  %1204 = vmatprep.mubr.bf16.mxu0 0
  %1205 = vmatmul.mubr.bf16.gmra.mrb[0].mxu0 %v1110
  %v1206 = vpop.f32.mrb[0].mxu0
  %v1207 = vadd.f32 %v1115, %v1206
  %v1208 = vpop.f32.mrb[0].mxu0
  %v1209 = vpop.f32.mrb[0].mxu0
  %v1210 = vadd.f32 %v1115, %v1209
  %v1211 = vpop.f32.mrb[0].mxu0
  %1212 = vdwg.mxu0
  %v1213 = vadd.f32 %v1199, %v1202
  %v1214 = vadd.f32 %v1213, %v1207
  %v1215 = vadd.f32 %v1214, %v1210
  %v1216 = vrot.slane %v1215, 4
  %v1217 = vadd.f32 %v1215, %v1216
  %v1218 = vrot.slane %v1217, 2
  %v1219 = vadd.f32 %v1217, %v1218
  %v1220 = vrot.slane %v1219, 1
  %v1221 = vadd.f32 %v1219, %v1220
  %v1222 = vmul.f32 %v1199, %v1199
  %v1223 = vmul.f32 %v1202, %v1202
  %v1224 = vmul.f32 %v1207, %v1207
  %v1225 = vmul.f32 %v1210, %v1210
  %v1226 = vadd.f32 %v1222, %v1223
  %v1227 = vadd.f32 %v1226, %v1224
  %v1228 = vadd.f32 %v1227, %v1225
  %v1229 = vrot.slane %v1228, 4
  %v1230 = vadd.f32 %v1228, %v1229
  %v1231 = vrot.slane %v1230, 2
  %v1232 = vadd.f32 %v1230, %v1231
  %v1233 = vrot.slane %v1232, 1
  %v1234 = vadd.f32 %v1232, %v1233
  %v1235 = vsel %vm282, %v1221, %v1234
  %v1236 = vld [vmem:[%s11] sm:$0xf]
  %v1237 = vld [vmem:[%s11 + $0x4] sm:$0xf]
  %v1238 = vld [vmem:[%s11 + $0x8] sm:$0xf]
  %v1239 = vld [vmem:[%s11 + $0xc] sm:$0xf]
  %v1240 = vld [vmem:[%s11 + $0x10] sm:$0xf]
  %v1241 = vld [vmem:[%s11 + $0x14] sm:$0xf]
  %v1242 = vld [vmem:[%s11 + $0x18] sm:$0xf]
  %v1243 = vld [vmem:[%s11 + $0x1c] sm:$0xf]
  %v1244 = vld [vmem:[%s11 + $0x20] sm:$0xf]
  %v1245 = vld [vmem:[%s11 + $0x24] sm:$0xf]
  %v1246 = vld [vmem:[%s11 + $0x28] sm:$0xf]
  %v1247 = vld [vmem:[%s11 + $0x2c] sm:$0xf]
  %v1248 = vld [vmem:[%s11 + $0x30] sm:$0xf]
  %v1249 = vld [vmem:[%s11 + $0x34] sm:$0xf]
  %v1250 = vld [vmem:[%s11 + $0x38] sm:$0xf]
  %v1251 = vld [vmem:[%s11 + $0x3c] sm:$0xf]
  %v1252 = vpack.c.bf16 %v1235, %v1235
  %v1253 = vunpack.c.l.bf16 %v1252
  %v1254 = vsub.f32 %v1235, %v1253
  %v1255 = vpack.c.bf16 %v1254, %v1254
  %v1272 = vunpack.c.l.b16 %v1236
  %v1273 = vunpack.c.l.b16 %v1237
  %v1274 = vunpack.c.l.b16 %v1238
  %v1275 = vunpack.c.l.b16 %v1239
  %v1276 = vunpack.c.l.b16 %v1240
  %v1277 = vunpack.c.l.b16 %v1241
  %v1278 = vunpack.c.l.b16 %v1242
  %v1279 = vunpack.c.l.b16 %v1243
  %v1280 = vunpack.c.l.b16 %v1244
  %v1281 = vunpack.c.l.b16 %v1245
  %v1282 = vunpack.c.l.b16 %v1246
  %v1283 = vunpack.c.l.b16 %v1247
  %v1284 = vunpack.c.l.b16 %v1248
  %v1285 = vunpack.c.l.b16 %v1249
  %v1286 = vunpack.c.l.b16 %v1250
  %v1287 = vunpack.c.l.b16 %v1251
  %v1288 = vpack.c.b16 %v1273, %v1272
  %v1289 = vpack.c.b16 %v1275, %v1274
  %v1290 = vpack.c.b16 %v1277, %v1276
  %v1291 = vpack.c.b16 %v1279, %v1278
  %v1292 = vpack.c.b16 %v1281, %v1280
  %v1293 = vpack.c.b16 %v1283, %v1282
  %v1294 = vpack.c.b16 %v1285, %v1284
  %v1295 = vpack.c.b16 %v1287, %v1286
  %1304 = vmatprep.subr.bf16.mxu0 0
  %1305 = vmatpush1.bf16.msra.mxu0 %v1288
  %1306 = vmatprep.subr.bf16.mxu0 0
  %1307 = vmatpush1.bf16.msra.mxu0 %v1289
  %1308 = vmatprep.subr.bf16.mxu0 0
  %1309 = vmatpush1.bf16.msra.mxu0 %v1290
  %1310 = vmatprep.subr.bf16.mxu0 0
  %1311 = vmatpush1.bf16.msra.mxu0 %v1291
  %1312 = vmatprep.subr.bf16.mxu0 0
  %1313 = vmatpush1.bf16.msra.mxu0 %v1292
  %1314 = vmatprep.subr.bf16.mxu0 0
  %1315 = vmatpush1.bf16.msra.mxu0 %v1293
  %1316 = vmatprep.subr.bf16.mxu0 0
  %1317 = vmatpush1.bf16.msra.mxu0 %v1294
  %1318 = vmatprep.subr.bf16.mxu0 0
  %1319 = vmatpush1.bf16.msra.mxu0 %v1295
  %1320 = vmatprep.subr.bf16.mxu0 0
  %1321 = vmatpush1.bf16.msra.mxu0 0
  %1322 = vmatprep.subr.bf16.mxu0 0
  %1323 = vmatpush1.bf16.msra.mxu0 0
  %1324 = vmatprep.subr.bf16.mxu0 0
  %1325 = vmatpush1.bf16.msra.mxu0 0
  %1326 = vmatprep.subr.bf16.mxu0 0
  %1327 = vmatpush1.bf16.msra.mxu0 0
  %1328 = vmatprep.subr.bf16.mxu0 0
  %1329 = vmatpush1.bf16.msra.mxu0 0
  %1330 = vmatprep.subr.bf16.mxu0 0
  %1331 = vmatpush1.bf16.msra.mxu0 0
  %1332 = vmatprep.subr.bf16.mxu0 0
  %1333 = vmatpush1.bf16.msra.mxu0 0
  %1334 = vmatprep.subr.bf16.mxu0 0
  %1335 = vmatpush1.bf16.msra.mxu0 0
  %1336 = vmatprep.mubr.bf16.mxu0 0
  %1337 = vmatmul.mubr.bf16.gmra.mrb[0].mxu0 %v1255
  %v1338 = vpop.f32.mrb[0].mxu0
  %v1339 = vadd.f32 0.0, %v1338
  %v1340 = vpop.f32.mrb[0].mxu0
  %v1341 = vpop.f32.mrb[0].mxu0
  %v1342 = vpop.f32.mrb[0].mxu0
  %1343 = vdwg.mxu0
  %1344 = vmatprep.subr.bf16.mxu0 0
  %1345 = vmatpush1.bf16.msra.mxu0 %v1288
  %1346 = vmatprep.subr.bf16.mxu0 0
  %1347 = vmatpush1.bf16.msra.mxu0 %v1289
  %1348 = vmatprep.subr.bf16.mxu0 0
  %1349 = vmatpush1.bf16.msra.mxu0 %v1290
  %1350 = vmatprep.subr.bf16.mxu0 0
  %1351 = vmatpush1.bf16.msra.mxu0 %v1291
  %1352 = vmatprep.subr.bf16.mxu0 0
  %1353 = vmatpush1.bf16.msra.mxu0 %v1292
  %1354 = vmatprep.subr.bf16.mxu0 0
  %1355 = vmatpush1.bf16.msra.mxu0 %v1293
  %1356 = vmatprep.subr.bf16.mxu0 0
  %1357 = vmatpush1.bf16.msra.mxu0 %v1294
  %1358 = vmatprep.subr.bf16.mxu0 0
  %1359 = vmatpush1.bf16.msra.mxu0 %v1295
  %1360 = vmatprep.subr.bf16.mxu0 0
  %1361 = vmatpush1.bf16.msra.mxu0 0
  %1362 = vmatprep.subr.bf16.mxu0 0
  %1363 = vmatpush1.bf16.msra.mxu0 0
  %1364 = vmatprep.subr.bf16.mxu0 0
  %1365 = vmatpush1.bf16.msra.mxu0 0
  %1366 = vmatprep.subr.bf16.mxu0 0
  %1367 = vmatpush1.bf16.msra.mxu0 0
  %1368 = vmatprep.subr.bf16.mxu0 0
  %1369 = vmatpush1.bf16.msra.mxu0 0
  %1370 = vmatprep.subr.bf16.mxu0 0
  %1371 = vmatpush1.bf16.msra.mxu0 0
  %1372 = vmatprep.subr.bf16.mxu0 0
  %1373 = vmatpush1.bf16.msra.mxu0 0
  %1374 = vmatprep.subr.bf16.mxu0 0
  %1375 = vmatpush1.bf16.msra.mxu0 0
  %1376 = vmatprep.mubr.bf16.mxu0 0
  %1377 = vmatmul.mubr.bf16.gmra.mrb[0].mxu0 %v1252
  %v1378 = vpop.f32.mrb[0].mxu0
  %v1379 = vadd.f32 %v1339, %v1378
  %v1380 = vpop.f32.mrb[0].mxu0
  %v1381 = vpop.f32.mrb[0].mxu0
  %v1382 = vpop.f32.mrb[0].mxu0
  %1383 = vdwg.mxu0
  %v1384 = vmul.f32 %v1379, 0.001953125
  %v1385 = vmul.f32 %v1384, %v1384
  %v1387 = vrot.slane %v1385, 7
  %v1389 = vsub.f32 %v1384, %v1387
  %v1390 = vmax.f32 %v1389, 0.0
  %v1391 = vsel %vm282, %v1384, %v1390
  %v1392 = vld [vmem:[%s12] sm:$0xf]
  %v1393 = vpack.c.bf16 %v1391, %v1391
  %v1394 = vunpack.c.l.bf16 %v1393
  %v1395 = vsub.f32 %v1391, %v1394
  %v1396 = vpack.c.bf16 %v1395, %v1395
  %v1398 = vsel %vm445, %v1396, 0
  %v1401 = vsel %vm449, %v1392, 0
  %1403 = vmatprep.subr.bf16.mxu0 0
  %1404 = vmatpush1.bf16.msra.mxu0 %v1401
  %1405 = vmatprep.subr.bf16.mxu0 0
  %1406 = vmatpush1.bf16.msra.mxu0 0
  %1407 = vmatprep.subr.bf16.mxu0 0
  %1408 = vmatpush1.bf16.msra.mxu0 0
  %1409 = vmatprep.subr.bf16.mxu0 0
  %1410 = vmatpush1.bf16.msra.mxu0 0
  %1411 = vmatprep.subr.bf16.mxu0 0
  %1412 = vmatpush1.bf16.msra.mxu0 0
  %1413 = vmatprep.subr.bf16.mxu0 0
  %1414 = vmatpush1.bf16.msra.mxu0 0
  %1415 = vmatprep.subr.bf16.mxu0 0
  %1416 = vmatpush1.bf16.msra.mxu0 0
  %1417 = vmatprep.subr.bf16.mxu0 0
  %1418 = vmatpush1.bf16.msra.mxu0 0
  %1419 = vmatprep.subr.bf16.mxu0 0
  %1420 = vmatpush1.bf16.msra.mxu0 0
  %1421 = vmatprep.subr.bf16.mxu0 0
  %1422 = vmatpush1.bf16.msra.mxu0 0
  %1423 = vmatprep.subr.bf16.mxu0 0
  %1424 = vmatpush1.bf16.msra.mxu0 0
  %1425 = vmatprep.subr.bf16.mxu0 0
  %1426 = vmatpush1.bf16.msra.mxu0 0
  %1427 = vmatprep.subr.bf16.mxu0 0
  %1428 = vmatpush1.bf16.msra.mxu0 0
  %1429 = vmatprep.subr.bf16.mxu0 0
  %1430 = vmatpush1.bf16.msra.mxu0 0
  %1431 = vmatprep.subr.bf16.mxu0 0
  %1432 = vmatpush1.bf16.msra.mxu0 0
  %1433 = vmatprep.subr.bf16.mxu0 0
  %1434 = vmatpush1.bf16.msra.mxu0 0
  %1435 = vmatprep.mubr.bf16.mxu0 0
  %1436 = vmatmul.mubr.bf16.gmra.mrb[0].mxu0 %v1398
  %v1437 = vpop.f32.mrb[0].mxu0
  %v1438 = vadd.f32 0.0, %v1437
  %v1439 = vpop.f32.mrb[0].mxu0
  %v1440 = vpop.f32.mrb[0].mxu0
  %v1441 = vpop.f32.mrb[0].mxu0
  %1442 = vdwg.mxu0
  %v1444 = vsel %vm445, %v1393, 0
  %1446 = vmatprep.subr.bf16.mxu0 0
  %1447 = vmatpush1.bf16.msra.mxu0 %v1401
  %1448 = vmatprep.subr.bf16.mxu0 0
  %1449 = vmatpush1.bf16.msra.mxu0 0
  %1450 = vmatprep.subr.bf16.mxu0 0
  %1451 = vmatpush1.bf16.msra.mxu0 0
  %1452 = vmatprep.subr.bf16.mxu0 0
  %1453 = vmatpush1.bf16.msra.mxu0 0
  %1454 = vmatprep.subr.bf16.mxu0 0
  %1455 = vmatpush1.bf16.msra.mxu0 0
  %1456 = vmatprep.subr.bf16.mxu0 0
  %1457 = vmatpush1.bf16.msra.mxu0 0
  %1458 = vmatprep.subr.bf16.mxu0 0
  %1459 = vmatpush1.bf16.msra.mxu0 0
  %1460 = vmatprep.subr.bf16.mxu0 0
  %1461 = vmatpush1.bf16.msra.mxu0 0
  %1462 = vmatprep.subr.bf16.mxu0 0
  %1463 = vmatpush1.bf16.msra.mxu0 0
  %1464 = vmatprep.subr.bf16.mxu0 0
  %1465 = vmatpush1.bf16.msra.mxu0 0
  %1466 = vmatprep.subr.bf16.mxu0 0
  %1467 = vmatpush1.bf16.msra.mxu0 0
  %1468 = vmatprep.subr.bf16.mxu0 0
  %1469 = vmatpush1.bf16.msra.mxu0 0
  %1470 = vmatprep.subr.bf16.mxu0 0
  %1471 = vmatpush1.bf16.msra.mxu0 0
  %1472 = vmatprep.subr.bf16.mxu0 0
  %1473 = vmatpush1.bf16.msra.mxu0 0
  %1474 = vmatprep.subr.bf16.mxu0 0
  %1475 = vmatpush1.bf16.msra.mxu0 0
  %1476 = vmatprep.subr.bf16.mxu0 0
  %1477 = vmatpush1.bf16.msra.mxu0 0
  %1478 = vmatprep.mubr.bf16.mxu0 0
  %1479 = vmatmul.mubr.bf16.gmra.mrb[0].mxu0 %v1444
  %v1480 = vpop.f32.mrb[0].mxu0
  %v1481 = vadd.f32 %v1438, %v1480
  %v1482 = vpop.f32.mrb[0].mxu0
  %v1483 = vpop.f32.mrb[0].mxu0
  %v1484 = vpop.f32.mrb[0].mxu0
  %1485 = vdwg.mxu0
  %v1486 = vadd.f32 %v1481, 1e-05
  %v1487 = vrsqrt.pop %v1486
  %v1488 = vmul.f32 %v1111, %v1487
  %v1490 = vrot.slane %v1488, 1
  %v1492 = vmul.f32 %v1481, %v1490
  %v1494 = vrot.slane %v1492, 6
  %v1496 = vsub.f32 %v1111, %v1494
  %v1497 = vlaneseq
  %v1498 = vshrl.u32 %v1497, 7
  %v1499 = vsub.s32 1, %v1498
  %v1500 = vrot.slane %v1488, %v1499
  %v1501 = vmul.f32 %v1199, %v1500
  %v1502 = vmul.f32 %v1202, %v1500
  %v1503 = vmul.f32 %v1207, %v1500
  %v1504 = vmul.f32 %v1210, %v1500
  %v1505 = vlaneseq
  %v1506 = vshrl.u32 %v1505, 7
  %v1507 = vsub.s32 2, %v1506
  %v1508 = vrot.slane %v1496, %v1507
  %v1509 = vadd.f32 %v1501, %v1508
  %v1510 = vadd.f32 %v1502, %v1508
  %v1511 = vadd.f32 %v1503, %v1508
  %v1512 = vadd.f32 %v1504, %v1508
  %v1513 = vmax.f32 %v1509, 0.0
  %v1514 = vmax.f32 %v1510, 0.0
  %v1515 = vmax.f32 %v1511, 0.0
  %v1516 = vmax.f32 %v1512, 0.0
  %v1517 = vld [vmem:[%s14] sm:$0xf]
  %v1518 = vld [vmem:[%s14 + $0x4] sm:$0xf]
  %v1519 = vld [vmem:[%s14 + $0x8] sm:$0xf]
  %v1520 = vld [vmem:[%s14 + $0xc] sm:$0xf]
  %v1521 = vld [vmem:[%s14 + $0x10] sm:$0xf]
  %v1522 = vld [vmem:[%s14 + $0x14] sm:$0xf]
  %v1523 = vld [vmem:[%s14 + $0x18] sm:$0xf]
  %v1524 = vld [vmem:[%s14 + $0x1c] sm:$0xf]
  %v1525 = vld [vmem:[%s14 + $0x20] sm:$0xf]
  %v1526 = vld [vmem:[%s14 + $0x24] sm:$0xf]
  %v1527 = vld [vmem:[%s14 + $0x28] sm:$0xf]
  %v1528 = vld [vmem:[%s14 + $0x2c] sm:$0xf]
  %v1529 = vld [vmem:[%s14 + $0x30] sm:$0xf]
  %v1530 = vld [vmem:[%s14 + $0x34] sm:$0xf]
  %v1531 = vld [vmem:[%s14 + $0x38] sm:$0xf]
  %v1532 = vld [vmem:[%s14 + $0x3c] sm:$0xf]
  %v1533 = vpack.c.bf16 %v1514, %v1513
  %v1534 = vpack.c.bf16 %v1516, %v1515
  %v1535 = vld [vmem:[%s15] sm:$0x1]
  %v1537 = vlaneseq
  %v1538 = vshrl.u32 %v1537, 7
  %v1539 = vsub.s32 0, %v1538
  %v1540 = vrot.slane %v1535, %v1539
  %v1558 = vunpack.c.l.b16 %v1517
  %v1559 = vunpack.c.l.b16 %v1518
  %v1560 = vunpack.c.l.b16 %v1519
  %v1561 = vunpack.c.l.b16 %v1520
  %v1562 = vunpack.c.l.b16 %v1521
  %v1563 = vunpack.c.l.b16 %v1522
  %v1564 = vunpack.c.l.b16 %v1523
  %v1565 = vunpack.c.l.b16 %v1524
  %v1566 = vunpack.c.l.b16 %v1525
  %v1567 = vunpack.c.l.b16 %v1526
  %v1568 = vunpack.c.l.b16 %v1527
  %v1569 = vunpack.c.l.b16 %v1528
  %v1570 = vunpack.c.l.b16 %v1529
  %v1571 = vunpack.c.l.b16 %v1530
  %v1572 = vunpack.c.l.b16 %v1531
  %v1573 = vunpack.c.l.b16 %v1532
  %v1574 = vpack.c.b16 %v1559, %v1558
  %v1575 = vpack.c.b16 %v1561, %v1560
  %v1576 = vpack.c.b16 %v1563, %v1562
  %v1577 = vpack.c.b16 %v1565, %v1564
  %v1578 = vpack.c.b16 %v1567, %v1566
  %v1579 = vpack.c.b16 %v1569, %v1568
  %v1580 = vpack.c.b16 %v1571, %v1570
  %v1581 = vpack.c.b16 %v1573, %v1572
  %1590 = vmatprep.subr.bf16.mxu0 0
  %1591 = vmatpush1.bf16.msra.mxu0 %v1574
  %1592 = vmatprep.subr.bf16.mxu0 0
  %1593 = vmatpush1.bf16.msra.mxu0 %v1575
  %1594 = vmatprep.subr.bf16.mxu0 0
  %1595 = vmatpush1.bf16.msra.mxu0 %v1576
  %1596 = vmatprep.subr.bf16.mxu0 0
  %1597 = vmatpush1.bf16.msra.mxu0 %v1577
  %1598 = vmatprep.subr.bf16.mxu0 0
  %1599 = vmatpush1.bf16.msra.mxu0 %v1578
  %1600 = vmatprep.subr.bf16.mxu0 0
  %1601 = vmatpush1.bf16.msra.mxu0 %v1579
  %1602 = vmatprep.subr.bf16.mxu0 0
  %1603 = vmatpush1.bf16.msra.mxu0 %v1580
  %1604 = vmatprep.subr.bf16.mxu0 0
  %1605 = vmatpush1.bf16.msra.mxu0 %v1581
  %1606 = vmatprep.subr.bf16.mxu0 0
  %1607 = vmatpush1.bf16.msra.mxu0 0
  %1608 = vmatprep.subr.bf16.mxu0 0
  %1609 = vmatpush1.bf16.msra.mxu0 0
  %1610 = vmatprep.subr.bf16.mxu0 0
  %1611 = vmatpush1.bf16.msra.mxu0 0
  %1612 = vmatprep.subr.bf16.mxu0 0
  %1613 = vmatpush1.bf16.msra.mxu0 0
  %1614 = vmatprep.subr.bf16.mxu0 0
  %1615 = vmatpush1.bf16.msra.mxu0 0
  %1616 = vmatprep.subr.bf16.mxu0 0
  %1617 = vmatpush1.bf16.msra.mxu0 0
  %1618 = vmatprep.subr.bf16.mxu0 0
  %1619 = vmatpush1.bf16.msra.mxu0 0
  %1620 = vmatprep.subr.bf16.mxu0 0
  %1621 = vmatpush1.bf16.msra.mxu0 0
  %1622 = vmatprep.mubr.bf16.mxu0 0
  %1623 = vmatmul.mubr.bf16.gmra.mrb[0].mxu0 %v1533
  %v1624 = vpop.f32.mrb[0].mxu0
  %v1625 = vadd.f32 %v1540, %v1624
  %v1626 = vpop.f32.mrb[0].mxu0
  %v1627 = vpop.f32.mrb[0].mxu0
  %v1628 = vadd.f32 %v1540, %v1627
  %v1629 = vpop.f32.mrb[0].mxu0
  %1630 = vmatprep.mubr.bf16.mxu0 0
  %1631 = vmatmul.mubr.bf16.gmra.mrb[0].mxu0 %v1534
  %v1632 = vpop.f32.mrb[0].mxu0
  %v1633 = vadd.f32 %v1540, %v1632
  %v1634 = vpop.f32.mrb[0].mxu0
  %v1635 = vpop.f32.mrb[0].mxu0
  %v1636 = vadd.f32 %v1540, %v1635
  %v1637 = vpop.f32.mrb[0].mxu0
  %1638 = vdwg.mxu0
  %1639 = vst [vmem:[%s16] sm:$0xff] %v1625
  %1640 = vst [vmem:[%s16 + $0x8] sm:$0xff] %v1628
  %1641 = vst [vmem:[%s16 + $0x10] sm:$0xff] %v1633
  %1642 = vst [vmem:[%s16 + $0x18] sm:$0xff] %v1636
  // Predicated region
  $region66: #{_apply.1} parent=0 // pred_check
    _
  $region67: #{_apply.1} parent=0 // pred_check_branch
    %1644 = sbr.rel (0) target = $region69
  $region68: #{_apply.1} parent=0 // pred_region
    _
  $region69: #{_apply.1} parent=0 // pred_fallthru
    _
  // Predicated region
  $region70: #{_apply.1} parent=0 // pred_check
    _
  $region71: #{_apply.1} parent=0 // pred_check_branch
    %1646 = sbr.rel (0) target = $region73
  $region72: #{_apply.1} parent=0 // pred_region
    _
  $region73: #{_apply.1} parent=0 // pred_fallthru
    _

</llo_original>
